<compile_context>
chip_gen: v7x
topology: tpu7x:2x2x1
jax: 0.10.0
libtpu: 0.0.40
codegen_flags: <defaults>
</compile_context>

<pallas_src>
import functools

import jax
import jax.numpy as jnp
from jax import lax
from jax.experimental import pallas as pl
from jax.experimental.pallas import tpu as pltpu


# ----------------------------------------------------------------------------
# One-time parameter preparation (weight stacking / transposes / padding).
# ----------------------------------------------------------------------------
def _interleave_gate_cols(mat_f, mat_b, hidden):
    """mat_f, mat_b: (4H, K) PyTorch-layout weights (rows = gates i,f,g,o).

    Returns (K, 8H) with columns ordered [i_f,i_b, f_f,f_b, g_f,g_b, o_f,o_b].
    """
    H = hidden
    cols = []
    for k in range(4):
        cols.append(jnp.transpose(mat_f[k * H:(k + 1) * H, :]))
        cols.append(jnp.transpose(mat_b[k * H:(k + 1) * H, :]))
    return jnp.concatenate(cols, axis=1)


def _interleave_gate_bias(b_f, b_b, hidden):
    H = hidden
    segs = []
    for k in range(4):
        segs.append(b_f[k * H:(k + 1) * H])
        segs.append(b_b[k * H:(k + 1) * H])
    return jnp.concatenate(segs).reshape(1, -1)


def prepare_params(params, hidden_size, lane_pad=128):
    """Restack the PyTorch-layout parameters once, outside the hot path."""
    H = hidden_size
    layers = []
    for lp in params["lstm_layers"]:
        # Stacked input projection: (In, 8H), both directions in one matmul.
        wx = _interleave_gate_cols(lp["w_ih_f"], lp["w_ih_b"], H)
        # Folded bias b_ih + b_hh per direction: (1, 8H).
        bx = _interleave_gate_bias(lp["b_ih_f"] + lp["b_hh_f"],
                                   lp["b_ih_b"] + lp["b_hh_b"], H)
        # Block-diagonal recurrent projection: (2H, 8H); rows 0:H act on the
        # forward hidden state, rows H:2H on the backward hidden state.
        top = _interleave_gate_cols(lp["w_hh_f"], jnp.zeros_like(lp["w_hh_b"]), H)
        bot = _interleave_gate_cols(jnp.zeros_like(lp["w_hh_f"]), lp["w_hh_b"], H)
        wh = jnp.concatenate([top, bot], axis=0)
        layers.append(dict(
            wx=wx.astype(jnp.bfloat16),
            wh=wh.astype(jnp.bfloat16),
            b=bx.astype(jnp.float32),
        ))

    fc_w, fc_b = params["fc_w"], params["fc_b"]          # (C, F), (C,)
    C, F = fc_w.shape
    c_pad = max(lane_pad, C)
    # Pad FC to a lane-dense 128-wide output; padded classes get -1e30 bias so
    # the in-kernel softmax assigns them ~0 probability.
    fcw = jnp.zeros((F, c_pad), jnp.float32).at[:, :C].set(jnp.transpose(fc_w))
    fcb = jnp.full((1, c_pad), -1e30, jnp.float32).at[0, :C].set(fc_b)
    return dict(
        emb=params["emb"].astype(jnp.float32),
        layers=layers,
        fcw=fcw.astype(jnp.bfloat16),
        fcb=fcb,
    )


# ----------------------------------------------------------------------------
# Fused kernel: all LSTM layers (bidirectional) + ReLU/max-pool + FC + softmax.
# All tensors inside are 2-D, time-major (row index = t * B + b).
# ----------------------------------------------------------------------------
def _build_fused_kernel(L, B, H, num_layers, c_pad):
    H2, H8 = 2 * H, 8 * H

    def kernel(*refs):
        x_ref = refs[0]                              # (L*B, E)   f32
        layer_refs = refs[1:1 + 3 * num_layers]      # wx, wh, b per layer
        fcw_ref = refs[1 + 3 * num_layers]           # (F, c_pad) bf16
        fcb_ref = refs[2 + 3 * num_layers]           # (1, c_pad) f32
        out_ref = refs[3 + 3 * num_layers]           # (B, c_pad) f32

        # Lane mask over the 8H gate slab: True on forward-direction stripes
        # [0:H), [2H:3H), [4H:5H), [6H:7H).  Built once, hoisted out of loops.
        lane = lax.broadcasted_iota(jnp.int32, (B, H8), 1)
        fw_mask = jnp.zeros((B, H8), dtype=jnp.bool_)
        for k in range(4):
            lo, hi = 2 * k * H, (2 * k + 1) * H
            fw_mask = jnp.logical_or(
                fw_mask, jnp.logical_and(lane >= lo, lane < hi))

        x0 = x_ref[...]                              # (L*B, E) f32
        xin = x0
        out_by_time = None
        for l in range(num_layers):
            wx_ref = layer_refs[3 * l + 0]
            wh_ref = layer_refs[3 * l + 1]
            b_ref = layer_refs[3 * l + 2]
            wh = wh_ref[...]                         # (2H, 8H) bf16

            # Input projection for BOTH directions, hoisted out of the
            # recurrence: one (L*B, In) @ (In, 8H) MXU call + one bias add.
            xw = jnp.dot(xin.astype(jnp.bfloat16), wx_ref[...],
                         preferred_element_type=jnp.float32) + b_ref[...]

            h = jnp.zeros((B, H2), jnp.float32)      # [:, :H]=fw, [:, H:]=bw
            c = jnp.zeros((B, H2), jnp.float32)
            h_steps = []
            for t in range(L):                       # fully unrolled (static L)
                # fw consumes time t, bw consumes time L-1-t, in lock-step.
                gx = jnp.where(fw_mask,
                               xw[t * B:(t + 1) * B, :],
                               xw[(L - 1 - t) * B:(L - t) * B, :])
                gates = gx + jnp.dot(h.astype(jnp.bfloat16), wh,
                                     preferred_element_type=jnp.float32)
                # Full-width transcendentals on the EUP, sliced afterwards.
                sg = jax.nn.sigmoid(gates)
                th = jnp.tanh(gates)
                i_g = sg[:, 0 * H2:1 * H2]
                f_g = sg[:, 1 * H2:2 * H2]
                g_g = th[:, 2 * H2:3 * H2]
                o_g = sg[:, 3 * H2:4 * H2]
                c = f_g * c + i_g * g_g
                h = o_g * jnp.tanh(c)
                h_steps.append(h)

            # Re-align the backward half in time: out[t] = [h_fw(t), h_bw(t)].
            out_by_time = [
                jnp.concatenate(
                    [h_steps[t][:, :H], h_steps[L - 1 - t][:, H:]], axis=1)
                for t in range(L)
            ]
            xin = jnp.concatenate(out_by_time, axis=0)       # (L*B, 2H)
            # eval mode: inter-layer dropout is identity

        # Head: ReLU -> global max over the sequence -> FC -> softmax.
        # (max_t relu(x) == relu(max_t x) since relu is monotonic.)
        pooled_lstm = out_by_time[0]
        for t in range(1, L):
            pooled_lstm = jnp.maximum(pooled_lstm, out_by_time[t])
        pooled_lstm = jnp.maximum(pooled_lstm, 0.0)          # (B, 2H)

        pooled_emb = x0[0:B, :]
        for t in range(1, L):
            pooled_emb = jnp.maximum(pooled_emb, x0[t * B:(t + 1) * B, :])
        pooled_emb = jnp.maximum(pooled_emb, 0.0)            # (B, E)

        pooled = jnp.concatenate([pooled_lstm, pooled_emb], axis=1)  # (B, 2H+E)
        logits = jnp.dot(pooled.astype(jnp.bfloat16), fcw_ref[...],
                         preferred_element_type=jnp.float32) + fcb_ref[...]
        m = jnp.max(logits, axis=1, keepdims=True)
        e = jnp.exp(logits - m)
        denom = jnp.sum(e, axis=1, keepdims=True)
        out_ref[...] = e * pl.reciprocal(denom, approx=True)

    return kernel


def fused_forward(x_tm, layers, fcw, fcb, *, seq_len, batch, hidden):
    num_layers = len(layers)
    c_pad = fcw.shape[1]
    kernel = _build_fused_kernel(seq_len, batch, hidden, num_layers, c_pad)
    args = [x_tm]
    for lw in layers:
        args += [lw["wx"], lw["wh"], lw["b"]]
    args += [fcw, fcb]
    # Everything fits comfortably in VMEM at this size (a few hundred KB);
    # a batch/sequence grid with BlockSpec tiling should be added before
    # scaling up (v7x only has 64 MiB VMEM).
    return pl.pallas_call(
        kernel,
        out_shape=jax.ShapeDtypeStruct((batch, c_pad), jnp.float32),
        in_specs=[pl.BlockSpec(memory_space=pltpu.MemorySpace.VMEM)] * len(args),
        out_specs=pl.BlockSpec(memory_space=pltpu.MemorySpace.VMEM),
    )(*args)


# ----------------------------------------------------------------------------
# Full forward pass (embedding gather in JAX, everything else in one kernel).
# ----------------------------------------------------------------------------
@functools.partial(jax.jit, static_argnames=("num_classes",))
def model_forward(x_idx, prep, *, num_classes):
    B, L = x_idx.shape
    H = prep["layers"][0]["wh"].shape[0] // 2
    # Embedding gather, laid out time-major 2-D (row = t*B + b) so the fused
    # kernel needs no reshapes/transposes.
    ids_tm = jnp.transpose(x_idx).reshape(-1)                 # (L*B,)
    x_tm = prep["emb"][ids_tm]                                # (L*B, E) f32
    probs_pad = fused_forward(x_tm, prep["layers"], prep["fcw"], prep["fcb"],
                              seq_len=L, batch=B, hidden=H)
    return probs_pad[:, :num_classes]                         # (B, C)


# ----------------------------------------------------------------------------
# Deterministic parameter construction + demo run.
# ----------------------------------------------------------------------------
def make_params(key, n_vocab, embed_size, hidden_size, num_layers, num_classes):
    keys = iter(jax.random.split(key, 64))

    def nrm(shape, scale=0.1):
        return (scale * jax.random.normal(next(keys), shape)).astype(jnp.float32)

    emb = nrm((n_vocab, embed_size))
    emb = emb.at[n_vocab - 1].set(0.0)                  # padding_idx = n_vocab - 1

    lstm_layers = []
    for layer in range(num_layers):
        in_size = embed_size if layer == 0 else 2 * hidden_size
        lstm_layers.append(dict(
            w_ih_f=nrm((4 * hidden_size, in_size)),
            w_hh_f=nrm((4 * hidden_size, hidden_size)),
            b_ih_f=nrm((4 * hidden_size,)),
            b_hh_f=nrm((4 * hidden_size,)),
            w_ih_b=nrm((4 * hidden_size, in_size)),
            w_hh_b=nrm((4 * hidden_size, hidden_size)),
            b_ih_b=nrm((4 * hidden_size,)),
            b_hh_b=nrm((4 * hidden_size,)),
        ))

    fc_in = 2 * hidden_size + embed_size
    fc_w = nrm((num_classes, fc_in))
    fc_b = nrm((num_classes,))

    return dict(emb=emb, lstm_layers=lstm_layers, fc_w=fc_w, fc_b=fc_b)


if __name__ == "__main__":
    # Small config consistent with the module's forward.
    n_vocab, embed_size, hidden_size = 50, 32, 32
    num_layers, num_classes = 2, 2
    batch, pad_size = 2, 8          # seq length == pad_size (MaxPool1d kernel)

    key = jax.random.PRNGKey(0)
    k_param, k_idx = jax.random.split(key)

    params = make_params(k_param, n_vocab, embed_size, hidden_size,
                         num_layers, num_classes)
    prep = prepare_params(params, hidden_size)          # one-time weight prep

    x_idx = jax.random.randint(k_idx, (batch, pad_size), 0, n_vocab,
                               dtype=jnp.int32)

    probs = model_forward(x_idx, prep, num_classes=num_classes)
    probs = jax.block_until_ready(probs)

    assert probs.shape == (batch, num_classes)
    assert bool(jnp.all(jnp.isfinite(probs)))
    # Softmax uses the approximate EUP reciprocal -> slightly looser tolerance.
    assert bool(jnp.allclose(jnp.sum(probs, axis=1), 1.0, atol=5e-3))
    print("KERNEL_OK")
</pallas_src>

<mosaic_0001>
module attributes {stable_mosaic.version = 11 : i64} {
  func.func @kernel(%arg0: memref<16x32xf32, #tpu.memory_space<vmem>>, %arg1: memref<32x256xbf16, #tpu.memory_space<vmem>>, %arg2: memref<64x256xbf16, #tpu.memory_space<vmem>>, %arg3: memref<1x256xf32, #tpu.memory_space<vmem>>, %arg4: memref<64x256xbf16, #tpu.memory_space<vmem>>, %arg5: memref<64x256xbf16, #tpu.memory_space<vmem>>, %arg6: memref<1x256xf32, #tpu.memory_space<vmem>>, %arg7: memref<96x128xbf16, #tpu.memory_space<vmem>>, %arg8: memref<1x128xf32, #tpu.memory_space<vmem>>, %arg9: memref<2x128xf32, #tpu.memory_space<vmem>>) attributes {dimension_semantics = [], scalar_prefetch = 0 : i64, scratch_operands = 0 : i64, tpu.core_type = #tpu.core_type<tc>} {
    %0 = tpu.iota {dimensions = array<i32: 1>} : vector<2x256xi32>
    %false = arith.constant false
    %1 = vector.broadcast %false : i1 to vector<2x256xi1>
    %c0_i32 = arith.constant 0 : i32
    %2 = vector.broadcast %c0_i32 : i32 to vector<2x256xi32>
    %3 = arith.cmpi sge, %0, %2 : vector<2x256xi32>
    %c32_i32 = arith.constant 32 : i32
    %4 = vector.broadcast %c32_i32 : i32 to vector<2x256xi32>
    %5 = arith.cmpi slt, %0, %4 : vector<2x256xi32>
    %6 = arith.andi %3, %5 : vector<2x256xi1>
    %7 = arith.ori %1, %6 : vector<2x256xi1>
    %c64_i32 = arith.constant 64 : i32
    %8 = vector.broadcast %c64_i32 : i32 to vector<2x256xi32>
    %9 = arith.cmpi sge, %0, %8 : vector<2x256xi32>
    %c96_i32 = arith.constant 96 : i32
    %10 = vector.broadcast %c96_i32 : i32 to vector<2x256xi32>
    %11 = arith.cmpi slt, %0, %10 : vector<2x256xi32>
    %12 = arith.andi %9, %11 : vector<2x256xi1>
    %13 = arith.ori %7, %12 : vector<2x256xi1>
    %c128_i32 = arith.constant 128 : i32
    %14 = vector.broadcast %c128_i32 : i32 to vector<2x256xi32>
    %15 = arith.cmpi sge, %0, %14 : vector<2x256xi32>
    %c160_i32 = arith.constant 160 : i32
    %16 = vector.broadcast %c160_i32 : i32 to vector<2x256xi32>
    %17 = arith.cmpi slt, %0, %16 : vector<2x256xi32>
    %18 = arith.andi %15, %17 : vector<2x256xi1>
    %19 = arith.ori %13, %18 : vector<2x256xi1>
    %c192_i32 = arith.constant 192 : i32
    %20 = vector.broadcast %c192_i32 : i32 to vector<2x256xi32>
    %21 = arith.cmpi sge, %0, %20 : vector<2x256xi32>
    %c224_i32 = arith.constant 224 : i32
    %22 = vector.broadcast %c224_i32 : i32 to vector<2x256xi32>
    %23 = arith.cmpi slt, %0, %22 : vector<2x256xi32>
    %24 = arith.andi %21, %23 : vector<2x256xi1>
    %25 = arith.ori %19, %24 : vector<2x256xi1>
    %c0 = arith.constant 0 : index
    %c0_0 = arith.constant 0 : index
    %26 = vector.load %arg0[%c0, %c0_0] : memref<16x32xf32, #tpu.memory_space<vmem>>, vector<16x32xf32>
    %c0_1 = arith.constant 0 : index
    %c0_2 = arith.constant 0 : index
    %27 = vector.load %arg2[%c0_1, %c0_2] : memref<64x256xbf16, #tpu.memory_space<vmem>>, vector<64x256xbf16>
    %28 = arith.truncf %26 : vector<16x32xf32> to vector<16x32xbf16>
    %c0_3 = arith.constant 0 : index
    %c0_4 = arith.constant 0 : index
    %29 = vector.load %arg1[%c0_3, %c0_4] : memref<32x256xbf16, #tpu.memory_space<vmem>>, vector<32x256xbf16>
    %cst = arith.constant dense<0.000000e+00> : vector<16x256xf32>
    %30 = tpu.matmul %28, %29, %cst {dimension_numbers = #tpu.dot_dimension_numbers<[1], [0], [0], [1], [0, 0, 1, 1], [], []>} : vector<16x32xbf16>, vector<32x256xbf16>, vector<16x256xf32> -> vector<16x256xf32>
    %c0_5 = arith.constant 0 : index
    %c0_6 = arith.constant 0 : index
    %31 = vector.load %arg3[%c0_5, %c0_6] : memref<1x256xf32, #tpu.memory_space<vmem>>, vector<1x256xf32>
    %32 = vector.broadcast %31 : vector<1x256xf32> to vector<16x256xf32>
    %33 = arith.addf %30, %32 : vector<16x256xf32>
    %cst_7 = arith.constant 0.000000e+00 : f32
    %34 = vector.broadcast %cst_7 : f32 to vector<2x64xf32>
    %cst_8 = arith.constant 0.000000e+00 : f32
    %35 = vector.broadcast %cst_8 : f32 to vector<2x64xf32>
    %36 = vector.extract_strided_slice %33 {offsets = [0, 0], sizes = [2, 256], strides = [1, 1]} : vector<16x256xf32> to vector<2x256xf32>
    %37 = vector.extract_strided_slice %33 {offsets = [14, 0], sizes = [2, 256], strides = [1, 1]} : vector<16x256xf32> to vector<2x256xf32>
    %38 = arith.select %25, %36, %37 : vector<2x256xi1>, vector<2x256xf32>
    %39 = arith.truncf %34 : vector<2x64xf32> to vector<2x64xbf16>
    %cst_9 = arith.constant dense<0.000000e+00> : vector<2x256xf32>
    %40 = tpu.matmul %39, %27, %cst_9 {dimension_numbers = #tpu.dot_dimension_numbers<[1], [0], [0], [1], [0, 0, 1, 1], [], []>} : vector<2x64xbf16>, vector<64x256xbf16>, vector<2x256xf32> -> vector<2x256xf32>
    %41 = arith.addf %38, %40 : vector<2x256xf32>
    %42 = arith.negf %41 : vector<2x256xf32>
    %43 = math.exp %42 : vector<2x256xf32>
    %cst_10 = arith.constant 1.000000e+00 : f32
    %44 = vector.broadcast %cst_10 : f32 to vector<2x256xf32>
    %45 = arith.addf %44, %43 : vector<2x256xf32>
    %46 = arith.divf %44, %45 : vector<2x256xf32>
    %47 = math.tanh %41 : vector<2x256xf32>
    %48 = vector.extract_strided_slice %46 {offsets = [0, 0], sizes = [2, 64], strides = [1, 1]} : vector<2x256xf32> to vector<2x64xf32>
    %49 = vector.extract_strided_slice %46 {offsets = [0, 64], sizes = [2, 64], strides = [1, 1]} : vector<2x256xf32> to vector<2x64xf32>
    %50 = vector.extract_strided_slice %47 {offsets = [0, 128], sizes = [2, 64], strides = [1, 1]} : vector<2x256xf32> to vector<2x64xf32>
    %51 = vector.extract_strided_slice %46 {offsets = [0, 192], sizes = [2, 64], strides = [1, 1]} : vector<2x256xf32> to vector<2x64xf32>
    %52 = arith.mulf %49, %35 : vector<2x64xf32>
    %53 = arith.mulf %48, %50 : vector<2x64xf32>
    %54 = arith.addf %52, %53 : vector<2x64xf32>
    %55 = math.tanh %54 : vector<2x64xf32>
    %56 = arith.mulf %51, %55 : vector<2x64xf32>
    %57 = vector.extract_strided_slice %33 {offsets = [2, 0], sizes = [2, 256], strides = [1, 1]} : vector<16x256xf32> to vector<2x256xf32>
    %58 = vector.extract_strided_slice %33 {offsets = [12, 0], sizes = [2, 256], strides = [1, 1]} : vector<16x256xf32> to vector<2x256xf32>
    %59 = arith.select %25, %57, %58 : vector<2x256xi1>, vector<2x256xf32>
    %60 = arith.truncf %56 : vector<2x64xf32> to vector<2x64xbf16>
    %cst_11 = arith.constant dense<0.000000e+00> : vector<2x256xf32>
    %61 = tpu.matmul %60, %27, %cst_11 {dimension_numbers = #tpu.dot_dimension_numbers<[1], [0], [0], [1], [0, 0, 1, 1], [], []>} : vector<2x64xbf16>, vector<64x256xbf16>, vector<2x256xf32> -> vector<2x256xf32>
    %62 = arith.addf %59, %61 : vector<2x256xf32>
    %63 = arith.negf %62 : vector<2x256xf32>
    %64 = math.exp %63 : vector<2x256xf32>
    %cst_12 = arith.constant 1.000000e+00 : f32
    %65 = vector.broadcast %cst_12 : f32 to vector<2x256xf32>
    %66 = arith.addf %65, %64 : vector<2x256xf32>
    %67 = arith.divf %65, %66 : vector<2x256xf32>
    %68 = math.tanh %62 : vector<2x256xf32>
    %69 = vector.extract_strided_slice %67 {offsets = [0, 0], sizes = [2, 64], strides = [1, 1]} : vector<2x256xf32> to vector<2x64xf32>
    %70 = vector.extract_strided_slice %67 {offsets = [0, 64], sizes = [2, 64], strides = [1, 1]} : vector<2x256xf32> to vector<2x64xf32>
    %71 = vector.extract_strided_slice %68 {offsets = [0, 128], sizes = [2, 64], strides = [1, 1]} : vector<2x256xf32> to vector<2x64xf32>
    %72 = vector.extract_strided_slice %67 {offsets = [0, 192], sizes = [2, 64], strides = [1, 1]} : vector<2x256xf32> to vector<2x64xf32>
    %73 = arith.mulf %70, %54 : vector<2x64xf32>
    %74 = arith.mulf %69, %71 : vector<2x64xf32>
    %75 = arith.addf %73, %74 : vector<2x64xf32>
    %76 = math.tanh %75 : vector<2x64xf32>
    %77 = arith.mulf %72, %76 : vector<2x64xf32>
    %78 = vector.extract_strided_slice %33 {offsets = [4, 0], sizes = [2, 256], strides = [1, 1]} : vector<16x256xf32> to vector<2x256xf32>
    %79 = vector.extract_strided_slice %33 {offsets = [10, 0], sizes = [2, 256], strides = [1, 1]} : vector<16x256xf32> to vector<2x256xf32>
    %80 = arith.select %25, %78, %79 : vector<2x256xi1>, vector<2x256xf32>
    %81 = arith.truncf %77 : vector<2x64xf32> to vector<2x64xbf16>
    %cst_13 = arith.constant dense<0.000000e+00> : vector<2x256xf32>
    %82 = tpu.matmul %81, %27, %cst_13 {dimension_numbers = #tpu.dot_dimension_numbers<[1], [0], [0], [1], [0, 0, 1, 1], [], []>} : vector<2x64xbf16>, vector<64x256xbf16>, vector<2x256xf32> -> vector<2x256xf32>
    %83 = arith.addf %80, %82 : vector<2x256xf32>
    %84 = arith.negf %83 : vector<2x256xf32>
    %85 = math.exp %84 : vector<2x256xf32>
    %cst_14 = arith.constant 1.000000e+00 : f32
    %86 = vector.broadcast %cst_14 : f32 to vector<2x256xf32>
    %87 = arith.addf %86, %85 : vector<2x256xf32>
    %88 = arith.divf %86, %87 : vector<2x256xf32>
    %89 = math.tanh %83 : vector<2x256xf32>
    %90 = vector.extract_strided_slice %88 {offsets = [0, 0], sizes = [2, 64], strides = [1, 1]} : vector<2x256xf32> to vector<2x64xf32>
    %91 = vector.extract_strided_slice %88 {offsets = [0, 64], sizes = [2, 64], strides = [1, 1]} : vector<2x256xf32> to vector<2x64xf32>
    %92 = vector.extract_strided_slice %89 {offsets = [0, 128], sizes = [2, 64], strides = [1, 1]} : vector<2x256xf32> to vector<2x64xf32>
    %93 = vector.extract_strided_slice %88 {offsets = [0, 192], sizes = [2, 64], strides = [1, 1]} : vector<2x256xf32> to vector<2x64xf32>
    %94 = arith.mulf %91, %75 : vector<2x64xf32>
    %95 = arith.mulf %90, %92 : vector<2x64xf32>
    %96 = arith.addf %94, %95 : vector<2x64xf32>
    %97 = math.tanh %96 : vector<2x64xf32>
    %98 = arith.mulf %93, %97 : vector<2x64xf32>
    %99 = vector.extract_strided_slice %33 {offsets = [6, 0], sizes = [2, 256], strides = [1, 1]} : vector<16x256xf32> to vector<2x256xf32>
    %100 = vector.extract_strided_slice %33 {offsets = [8, 0], sizes = [2, 256], strides = [1, 1]} : vector<16x256xf32> to vector<2x256xf32>
    %101 = arith.select %25, %99, %100 : vector<2x256xi1>, vector<2x256xf32>
    %102 = arith.truncf %98 : vector<2x64xf32> to vector<2x64xbf16>
    %cst_15 = arith.constant dense<0.000000e+00> : vector<2x256xf32>
    %103 = tpu.matmul %102, %27, %cst_15 {dimension_numbers = #tpu.dot_dimension_numbers<[1], [0], [0], [1], [0, 0, 1, 1], [], []>} : vector<2x64xbf16>, vector<64x256xbf16>, vector<2x256xf32> -> vector<2x256xf32>
    %104 = arith.addf %101, %103 : vector<2x256xf32>
    %105 = arith.negf %104 : vector<2x256xf32>
    %106 = math.exp %105 : vector<2x256xf32>
    %cst_16 = arith.constant 1.000000e+00 : f32
    %107 = vector.broadcast %cst_16 : f32 to vector<2x256xf32>
    %108 = arith.addf %107, %106 : vector<2x256xf32>
    %109 = arith.divf %107, %108 : vector<2x256xf32>
    %110 = math.tanh %104 : vector<2x256xf32>
    %111 = vector.extract_strided_slice %109 {offsets = [0, 0], sizes = [2, 64], strides = [1, 1]} : vector<2x256xf32> to vector<2x64xf32>
    %112 = vector.extract_strided_slice %109 {offsets = [0, 64], sizes = [2, 64], strides = [1, 1]} : vector<2x256xf32> to vector<2x64xf32>
    %113 = vector.extract_strided_slice %110 {offsets = [0, 128], sizes = [2, 64], strides = [1, 1]} : vector<2x256xf32> to vector<2x64xf32>
    %114 = vector.extract_strided_slice %109 {offsets = [0, 192], sizes = [2, 64], strides = [1, 1]} : vector<2x256xf32> to vector<2x64xf32>
    %115 = arith.mulf %112, %96 : vector<2x64xf32>
    %116 = arith.mulf %111, %113 : vector<2x64xf32>
    %117 = arith.addf %115, %116 : vector<2x64xf32>
    %118 = math.tanh %117 : vector<2x64xf32>
    %119 = arith.mulf %114, %118 : vector<2x64xf32>
    %120 = vector.extract_strided_slice %33 {offsets = [8, 0], sizes = [2, 256], strides = [1, 1]} : vector<16x256xf32> to vector<2x256xf32>
    %121 = vector.extract_strided_slice %33 {offsets = [6, 0], sizes = [2, 256], strides = [1, 1]} : vector<16x256xf32> to vector<2x256xf32>
    %122 = arith.select %25, %120, %121 : vector<2x256xi1>, vector<2x256xf32>
    %123 = arith.truncf %119 : vector<2x64xf32> to vector<2x64xbf16>
    %cst_17 = arith.constant dense<0.000000e+00> : vector<2x256xf32>
    %124 = tpu.matmul %123, %27, %cst_17 {dimension_numbers = #tpu.dot_dimension_numbers<[1], [0], [0], [1], [0, 0, 1, 1], [], []>} : vector<2x64xbf16>, vector<64x256xbf16>, vector<2x256xf32> -> vector<2x256xf32>
    %125 = arith.addf %122, %124 : vector<2x256xf32>
    %126 = arith.negf %125 : vector<2x256xf32>
    %127 = math.exp %126 : vector<2x256xf32>
    %cst_18 = arith.constant 1.000000e+00 : f32
    %128 = vector.broadcast %cst_18 : f32 to vector<2x256xf32>
    %129 = arith.addf %128, %127 : vector<2x256xf32>
    %130 = arith.divf %128, %129 : vector<2x256xf32>
    %131 = math.tanh %125 : vector<2x256xf32>
    %132 = vector.extract_strided_slice %130 {offsets = [0, 0], sizes = [2, 64], strides = [1, 1]} : vector<2x256xf32> to vector<2x64xf32>
    %133 = vector.extract_strided_slice %130 {offsets = [0, 64], sizes = [2, 64], strides = [1, 1]} : vector<2x256xf32> to vector<2x64xf32>
    %134 = vector.extract_strided_slice %131 {offsets = [0, 128], sizes = [2, 64], strides = [1, 1]} : vector<2x256xf32> to vector<2x64xf32>
    %135 = vector.extract_strided_slice %130 {offsets = [0, 192], sizes = [2, 64], strides = [1, 1]} : vector<2x256xf32> to vector<2x64xf32>
    %136 = arith.mulf %133, %117 : vector<2x64xf32>
    %137 = arith.mulf %132, %134 : vector<2x64xf32>
    %138 = arith.addf %136, %137 : vector<2x64xf32>
    %139 = math.tanh %138 : vector<2x64xf32>
    %140 = arith.mulf %135, %139 : vector<2x64xf32>
    %141 = vector.extract_strided_slice %33 {offsets = [10, 0], sizes = [2, 256], strides = [1, 1]} : vector<16x256xf32> to vector<2x256xf32>
    %142 = vector.extract_strided_slice %33 {offsets = [4, 0], sizes = [2, 256], strides = [1, 1]} : vector<16x256xf32> to vector<2x256xf32>
    %143 = arith.select %25, %141, %142 : vector<2x256xi1>, vector<2x256xf32>
    %144 = arith.truncf %140 : vector<2x64xf32> to vector<2x64xbf16>
    %cst_19 = arith.constant dense<0.000000e+00> : vector<2x256xf32>
    %145 = tpu.matmul %144, %27, %cst_19 {dimension_numbers = #tpu.dot_dimension_numbers<[1], [0], [0], [1], [0, 0, 1, 1], [], []>} : vector<2x64xbf16>, vector<64x256xbf16>, vector<2x256xf32> -> vector<2x256xf32>
    %146 = arith.addf %143, %145 : vector<2x256xf32>
    %147 = arith.negf %146 : vector<2x256xf32>
    %148 = math.exp %147 : vector<2x256xf32>
    %cst_20 = arith.constant 1.000000e+00 : f32
    %149 = vector.broadcast %cst_20 : f32 to vector<2x256xf32>
    %150 = arith.addf %149, %148 : vector<2x256xf32>
    %151 = arith.divf %149, %150 : vector<2x256xf32>
    %152 = math.tanh %146 : vector<2x256xf32>
    %153 = vector.extract_strided_slice %151 {offsets = [0, 0], sizes = [2, 64], strides = [1, 1]} : vector<2x256xf32> to vector<2x64xf32>
    %154 = vector.extract_strided_slice %151 {offsets = [0, 64], sizes = [2, 64], strides = [1, 1]} : vector<2x256xf32> to vector<2x64xf32>
    %155 = vector.extract_strided_slice %152 {offsets = [0, 128], sizes = [2, 64], strides = [1, 1]} : vector<2x256xf32> to vector<2x64xf32>
    %156 = vector.extract_strided_slice %151 {offsets = [0, 192], sizes = [2, 64], strides = [1, 1]} : vector<2x256xf32> to vector<2x64xf32>
    %157 = arith.mulf %154, %138 : vector<2x64xf32>
    %158 = arith.mulf %153, %155 : vector<2x64xf32>
    %159 = arith.addf %157, %158 : vector<2x64xf32>
    %160 = math.tanh %159 : vector<2x64xf32>
    %161 = arith.mulf %156, %160 : vector<2x64xf32>
    %162 = vector.extract_strided_slice %33 {offsets = [12, 0], sizes = [2, 256], strides = [1, 1]} : vector<16x256xf32> to vector<2x256xf32>
    %163 = vector.extract_strided_slice %33 {offsets = [2, 0], sizes = [2, 256], strides = [1, 1]} : vector<16x256xf32> to vector<2x256xf32>
    %164 = arith.select %25, %162, %163 : vector<2x256xi1>, vector<2x256xf32>
    %165 = arith.truncf %161 : vector<2x64xf32> to vector<2x64xbf16>
    %cst_21 = arith.constant dense<0.000000e+00> : vector<2x256xf32>
    %166 = tpu.matmul %165, %27, %cst_21 {dimension_numbers = #tpu.dot_dimension_numbers<[1], [0], [0], [1], [0, 0, 1, 1], [], []>} : vector<2x64xbf16>, vector<64x256xbf16>, vector<2x256xf32> -> vector<2x256xf32>
    %167 = arith.addf %164, %166 : vector<2x256xf32>
    %168 = arith.negf %167 : vector<2x256xf32>
    %169 = math.exp %168 : vector<2x256xf32>
    %cst_22 = arith.constant 1.000000e+00 : f32
    %170 = vector.broadcast %cst_22 : f32 to vector<2x256xf32>
    %171 = arith.addf %170, %169 : vector<2x256xf32>
    %172 = arith.divf %170, %171 : vector<2x256xf32>
    %173 = math.tanh %167 : vector<2x256xf32>
    %174 = vector.extract_strided_slice %172 {offsets = [0, 0], sizes = [2, 64], strides = [1, 1]} : vector<2x256xf32> to vector<2x64xf32>
    %175 = vector.extract_strided_slice %172 {offsets = [0, 64], sizes = [2, 64], strides = [1, 1]} : vector<2x256xf32> to vector<2x64xf32>
    %176 = vector.extract_strided_slice %173 {offsets = [0, 128], sizes = [2, 64], strides = [1, 1]} : vector<2x256xf32> to vector<2x64xf32>
    %177 = vector.extract_strided_slice %172 {offsets = [0, 192], sizes = [2, 64], strides = [1, 1]} : vector<2x256xf32> to vector<2x64xf32>
    %178 = arith.mulf %175, %159 : vector<2x64xf32>
    %179 = arith.mulf %174, %176 : vector<2x64xf32>
    %180 = arith.addf %178, %179 : vector<2x64xf32>
    %181 = math.tanh %180 : vector<2x64xf32>
    %182 = arith.mulf %177, %181 : vector<2x64xf32>
    %183 = vector.extract_strided_slice %33 {offsets = [14, 0], sizes = [2, 256], strides = [1, 1]} : vector<16x256xf32> to vector<2x256xf32>
    %184 = vector.extract_strided_slice %33 {offsets = [0, 0], sizes = [2, 256], strides = [1, 1]} : vector<16x256xf32> to vector<2x256xf32>
    %185 = arith.select %25, %183, %184 : vector<2x256xi1>, vector<2x256xf32>
    %186 = arith.truncf %182 : vector<2x64xf32> to vector<2x64xbf16>
    %cst_23 = arith.constant dense<0.000000e+00> : vector<2x256xf32>
    %187 = tpu.matmul %186, %27, %cst_23 {dimension_numbers = #tpu.dot_dimension_numbers<[1], [0], [0], [1], [0, 0, 1, 1], [], []>} : vector<2x64xbf16>, vector<64x256xbf16>, vector<2x256xf32> -> vector<2x256xf32>
    %188 = arith.addf %185, %187 : vector<2x256xf32>
    %189 = arith.negf %188 : vector<2x256xf32>
    %190 = math.exp %189 : vector<2x256xf32>
    %cst_24 = arith.constant 1.000000e+00 : f32
    %191 = vector.broadcast %cst_24 : f32 to vector<2x256xf32>
    %192 = arith.addf %191, %190 : vector<2x256xf32>
    %193 = arith.divf %191, %192 : vector<2x256xf32>
    %194 = math.tanh %188 : vector<2x256xf32>
    %195 = vector.extract_strided_slice %193 {offsets = [0, 0], sizes = [2, 64], strides = [1, 1]} : vector<2x256xf32> to vector<2x64xf32>
    %196 = vector.extract_strided_slice %193 {offsets = [0, 64], sizes = [2, 64], strides = [1, 1]} : vector<2x256xf32> to vector<2x64xf32>
    %197 = vector.extract_strided_slice %194 {offsets = [0, 128], sizes = [2, 64], strides = [1, 1]} : vector<2x256xf32> to vector<2x64xf32>
    %198 = vector.extract_strided_slice %193 {offsets = [0, 192], sizes = [2, 64], strides = [1, 1]} : vector<2x256xf32> to vector<2x64xf32>
    %199 = arith.mulf %196, %180 : vector<2x64xf32>
    %200 = arith.mulf %195, %197 : vector<2x64xf32>
    %201 = arith.addf %199, %200 : vector<2x64xf32>
    %202 = math.tanh %201 : vector<2x64xf32>
    %203 = arith.mulf %198, %202 : vector<2x64xf32>
    %204 = vector.extract_strided_slice %56 {offsets = [0, 0], sizes = [2, 32], strides = [1, 1]} : vector<2x64xf32> to vector<2x32xf32>
    %205 = vector.extract_strided_slice %203 {offsets = [0, 32], sizes = [2, 32], strides = [1, 1]} : vector<2x64xf32> to vector<2x32xf32>
    %206 = tpu.concatenate %204, %205 in 1 : vector<2x32xf32>, vector<2x32xf32> -> vector<2x64xf32>
    %207 = vector.extract_strided_slice %77 {offsets = [0, 0], sizes = [2, 32], strides = [1, 1]} : vector<2x64xf32> to vector<2x32xf32>
    %208 = vector.extract_strided_slice %182 {offsets = [0, 32], sizes = [2, 32], strides = [1, 1]} : vector<2x64xf32> to vector<2x32xf32>
    %209 = tpu.concatenate %207, %208 in 1 : vector<2x32xf32>, vector<2x32xf32> -> vector<2x64xf32>
    %210 = vector.extract_strided_slice %98 {offsets = [0, 0], sizes = [2, 32], strides = [1, 1]} : vector<2x64xf32> to vector<2x32xf32>
    %211 = vector.extract_strided_slice %161 {offsets = [0, 32], sizes = [2, 32], strides = [1, 1]} : vector<2x64xf32> to vector<2x32xf32>
    %212 = tpu.concatenate %210, %211 in 1 : vector<2x32xf32>, vector<2x32xf32> -> vector<2x64xf32>
    %213 = vector.extract_strided_slice %119 {offsets = [0, 0], sizes = [2, 32], strides = [1, 1]} : vector<2x64xf32> to vector<2x32xf32>
    %214 = vector.extract_strided_slice %140 {offsets = [0, 32], sizes = [2, 32], strides = [1, 1]} : vector<2x64xf32> to vector<2x32xf32>
    %215 = tpu.concatenate %213, %214 in 1 : vector<2x32xf32>, vector<2x32xf32> -> vector<2x64xf32>
    %216 = vector.extract_strided_slice %140 {offsets = [0, 0], sizes = [2, 32], strides = [1, 1]} : vector<2x64xf32> to vector<2x32xf32>
    %217 = vector.extract_strided_slice %119 {offsets = [0, 32], sizes = [2, 32], strides = [1, 1]} : vector<2x64xf32> to vector<2x32xf32>
    %218 = tpu.concatenate %216, %217 in 1 : vector<2x32xf32>, vector<2x32xf32> -> vector<2x64xf32>
    %219 = vector.extract_strided_slice %161 {offsets = [0, 0], sizes = [2, 32], strides = [1, 1]} : vector<2x64xf32> to vector<2x32xf32>
    %220 = vector.extract_strided_slice %98 {offsets = [0, 32], sizes = [2, 32], strides = [1, 1]} : vector<2x64xf32> to vector<2x32xf32>
    %221 = tpu.concatenate %219, %220 in 1 : vector<2x32xf32>, vector<2x32xf32> -> vector<2x64xf32>
    %222 = vector.extract_strided_slice %182 {offsets = [0, 0], sizes = [2, 32], strides = [1, 1]} : vector<2x64xf32> to vector<2x32xf32>
    %223 = vector.extract_strided_slice %77 {offsets = [0, 32], sizes = [2, 32], strides = [1, 1]} : vector<2x64xf32> to vector<2x32xf32>
    %224 = tpu.concatenate %222, %223 in 1 : vector<2x32xf32>, vector<2x32xf32> -> vector<2x64xf32>
    %225 = vector.extract_strided_slice %203 {offsets = [0, 0], sizes = [2, 32], strides = [1, 1]} : vector<2x64xf32> to vector<2x32xf32>
    %226 = vector.extract_strided_slice %56 {offsets = [0, 32], sizes = [2, 32], strides = [1, 1]} : vector<2x64xf32> to vector<2x32xf32>
    %227 = tpu.concatenate %225, %226 in 1 : vector<2x32xf32>, vector<2x32xf32> -> vector<2x64xf32>
    %228 = tpu.concatenate %206, %209, %212, %215, %218, %221, %224, %227 in 0 : vector<2x64xf32>, vector<2x64xf32>, vector<2x64xf32>, vector<2x64xf32>, vector<2x64xf32>, vector<2x64xf32>, vector<2x64xf32>, vector<2x64xf32> -> vector<16x64xf32>
    %c0_25 = arith.constant 0 : index
    %c0_26 = arith.constant 0 : index
    %229 = vector.load %arg5[%c0_25, %c0_26] : memref<64x256xbf16, #tpu.memory_space<vmem>>, vector<64x256xbf16>
    %230 = arith.truncf %228 : vector<16x64xf32> to vector<16x64xbf16>
    %c0_27 = arith.constant 0 : index
    %c0_28 = arith.constant 0 : index
    %231 = vector.load %arg4[%c0_27, %c0_28] : memref<64x256xbf16, #tpu.memory_space<vmem>>, vector<64x256xbf16>
    %cst_29 = arith.constant dense<0.000000e+00> : vector<16x256xf32>
    %232 = tpu.matmul %230, %231, %cst_29 {dimension_numbers = #tpu.dot_dimension_numbers<[1], [0], [0], [1], [0, 0, 1, 1], [], []>} : vector<16x64xbf16>, vector<64x256xbf16>, vector<16x256xf32> -> vector<16x256xf32>
    %c0_30 = arith.constant 0 : index
    %c0_31 = arith.constant 0 : index
    %233 = vector.load %arg6[%c0_30, %c0_31] : memref<1x256xf32, #tpu.memory_space<vmem>>, vector<1x256xf32>
    %234 = vector.broadcast %233 : vector<1x256xf32> to vector<16x256xf32>
    %235 = arith.addf %232, %234 : vector<16x256xf32>
    %cst_32 = arith.constant 0.000000e+00 : f32
    %236 = vector.broadcast %cst_32 : f32 to vector<2x64xf32>
    %cst_33 = arith.constant 0.000000e+00 : f32
    %237 = vector.broadcast %cst_33 : f32 to vector<2x64xf32>
    %238 = vector.extract_strided_slice %235 {offsets = [0, 0], sizes = [2, 256], strides = [1, 1]} : vector<16x256xf32> to vector<2x256xf32>
    %239 = vector.extract_strided_slice %235 {offsets = [14, 0], sizes = [2, 256], strides = [1, 1]} : vector<16x256xf32> to vector<2x256xf32>
    %240 = arith.select %25, %238, %239 : vector<2x256xi1>, vector<2x256xf32>
    %241 = arith.truncf %236 : vector<2x64xf32> to vector<2x64xbf16>
    %cst_34 = arith.constant dense<0.000000e+00> : vector<2x256xf32>
    %242 = tpu.matmul %241, %229, %cst_34 {dimension_numbers = #tpu.dot_dimension_numbers<[1], [0], [0], [1], [0, 0, 1, 1], [], []>} : vector<2x64xbf16>, vector<64x256xbf16>, vector<2x256xf32> -> vector<2x256xf32>
    %243 = arith.addf %240, %242 : vector<2x256xf32>
    %244 = arith.negf %243 : vector<2x256xf32>
    %245 = math.exp %244 : vector<2x256xf32>
    %cst_35 = arith.constant 1.000000e+00 : f32
    %246 = vector.broadcast %cst_35 : f32 to vector<2x256xf32>
    %247 = arith.addf %246, %245 : vector<2x256xf32>
    %248 = arith.divf %246, %247 : vector<2x256xf32>
    %249 = math.tanh %243 : vector<2x256xf32>
    %250 = vector.extract_strided_slice %248 {offsets = [0, 0], sizes = [2, 64], strides = [1, 1]} : vector<2x256xf32> to vector<2x64xf32>
    %251 = vector.extract_strided_slice %248 {offsets = [0, 64], sizes = [2, 64], strides = [1, 1]} : vector<2x256xf32> to vector<2x64xf32>
    %252 = vector.extract_strided_slice %249 {offsets = [0, 128], sizes = [2, 64], strides = [1, 1]} : vector<2x256xf32> to vector<2x64xf32>
    %253 = vector.extract_strided_slice %248 {offsets = [0, 192], sizes = [2, 64], strides = [1, 1]} : vector<2x256xf32> to vector<2x64xf32>
    %254 = arith.mulf %251, %237 : vector<2x64xf32>
    %255 = arith.mulf %250, %252 : vector<2x64xf32>
    %256 = arith.addf %254, %255 : vector<2x64xf32>
    %257 = math.tanh %256 : vector<2x64xf32>
    %258 = arith.mulf %253, %257 : vector<2x64xf32>
    %259 = vector.extract_strided_slice %235 {offsets = [2, 0], sizes = [2, 256], strides = [1, 1]} : vector<16x256xf32> to vector<2x256xf32>
    %260 = vector.extract_strided_slice %235 {offsets = [12, 0], sizes = [2, 256], strides = [1, 1]} : vector<16x256xf32> to vector<2x256xf32>
    %261 = arith.select %25, %259, %260 : vector<2x256xi1>, vector<2x256xf32>
    %262 = arith.truncf %258 : vector<2x64xf32> to vector<2x64xbf16>
    %cst_36 = arith.constant dense<0.000000e+00> : vector<2x256xf32>
    %263 = tpu.matmul %262, %229, %cst_36 {dimension_numbers = #tpu.dot_dimension_numbers<[1], [0], [0], [1], [0, 0, 1, 1], [], []>} : vector<2x64xbf16>, vector<64x256xbf16>, vector<2x256xf32> -> vector<2x256xf32>
    %264 = arith.addf %261, %263 : vector<2x256xf32>
    %265 = arith.negf %264 : vector<2x256xf32>
    %266 = math.exp %265 : vector<2x256xf32>
    %cst_37 = arith.constant 1.000000e+00 : f32
    %267 = vector.broadcast %cst_37 : f32 to vector<2x256xf32>
    %268 = arith.addf %267, %266 : vector<2x256xf32>
    %269 = arith.divf %267, %268 : vector<2x256xf32>
    %270 = math.tanh %264 : vector<2x256xf32>
    %271 = vector.extract_strided_slice %269 {offsets = [0, 0], sizes = [2, 64], strides = [1, 1]} : vector<2x256xf32> to vector<2x64xf32>
    %272 = vector.extract_strided_slice %269 {offsets = [0, 64], sizes = [2, 64], strides = [1, 1]} : vector<2x256xf32> to vector<2x64xf32>
    %273 = vector.extract_strided_slice %270 {offsets = [0, 128], sizes = [2, 64], strides = [1, 1]} : vector<2x256xf32> to vector<2x64xf32>
    %274 = vector.extract_strided_slice %269 {offsets = [0, 192], sizes = [2, 64], strides = [1, 1]} : vector<2x256xf32> to vector<2x64xf32>
    %275 = arith.mulf %272, %256 : vector<2x64xf32>
    %276 = arith.mulf %271, %273 : vector<2x64xf32>
    %277 = arith.addf %275, %276 : vector<2x64xf32>
    %278 = math.tanh %277 : vector<2x64xf32>
    %279 = arith.mulf %274, %278 : vector<2x64xf32>
    %280 = vector.extract_strided_slice %235 {offsets = [4, 0], sizes = [2, 256], strides = [1, 1]} : vector<16x256xf32> to vector<2x256xf32>
    %281 = vector.extract_strided_slice %235 {offsets = [10, 0], sizes = [2, 256], strides = [1, 1]} : vector<16x256xf32> to vector<2x256xf32>
    %282 = arith.select %25, %280, %281 : vector<2x256xi1>, vector<2x256xf32>
    %283 = arith.truncf %279 : vector<2x64xf32> to vector<2x64xbf16>
    %cst_38 = arith.constant dense<0.000000e+00> : vector<2x256xf32>
    %284 = tpu.matmul %283, %229, %cst_38 {dimension_numbers = #tpu.dot_dimension_numbers<[1], [0], [0], [1], [0, 0, 1, 1], [], []>} : vector<2x64xbf16>, vector<64x256xbf16>, vector<2x256xf32> -> vector<2x256xf32>
    %285 = arith.addf %282, %284 : vector<2x256xf32>
    %286 = arith.negf %285 : vector<2x256xf32>
    %287 = math.exp %286 : vector<2x256xf32>
    %cst_39 = arith.constant 1.000000e+00 : f32
    %288 = vector.broadcast %cst_39 : f32 to vector<2x256xf32>
    %289 = arith.addf %288, %287 : vector<2x256xf32>
    %290 = arith.divf %288, %289 : vector<2x256xf32>
    %291 = math.tanh %285 : vector<2x256xf32>
    %292 = vector.extract_strided_slice %290 {offsets = [0, 0], sizes = [2, 64], strides = [1, 1]} : vector<2x256xf32> to vector<2x64xf32>
    %293 = vector.extract_strided_slice %290 {offsets = [0, 64], sizes = [2, 64], strides = [1, 1]} : vector<2x256xf32> to vector<2x64xf32>
    %294 = vector.extract_strided_slice %291 {offsets = [0, 128], sizes = [2, 64], strides = [1, 1]} : vector<2x256xf32> to vector<2x64xf32>
    %295 = vector.extract_strided_slice %290 {offsets = [0, 192], sizes = [2, 64], strides = [1, 1]} : vector<2x256xf32> to vector<2x64xf32>
    %296 = arith.mulf %293, %277 : vector<2x64xf32>
    %297 = arith.mulf %292, %294 : vector<2x64xf32>
    %298 = arith.addf %296, %297 : vector<2x64xf32>
    %299 = math.tanh %298 : vector<2x64xf32>
    %300 = arith.mulf %295, %299 : vector<2x64xf32>
    %301 = vector.extract_strided_slice %235 {offsets = [6, 0], sizes = [2, 256], strides = [1, 1]} : vector<16x256xf32> to vector<2x256xf32>
    %302 = vector.extract_strided_slice %235 {offsets = [8, 0], sizes = [2, 256], strides = [1, 1]} : vector<16x256xf32> to vector<2x256xf32>
    %303 = arith.select %25, %301, %302 : vector<2x256xi1>, vector<2x256xf32>
    %304 = arith.truncf %300 : vector<2x64xf32> to vector<2x64xbf16>
    %cst_40 = arith.constant dense<0.000000e+00> : vector<2x256xf32>
    %305 = tpu.matmul %304, %229, %cst_40 {dimension_numbers = #tpu.dot_dimension_numbers<[1], [0], [0], [1], [0, 0, 1, 1], [], []>} : vector<2x64xbf16>, vector<64x256xbf16>, vector<2x256xf32> -> vector<2x256xf32>
    %306 = arith.addf %303, %305 : vector<2x256xf32>
    %307 = arith.negf %306 : vector<2x256xf32>
    %308 = math.exp %307 : vector<2x256xf32>
    %cst_41 = arith.constant 1.000000e+00 : f32
    %309 = vector.broadcast %cst_41 : f32 to vector<2x256xf32>
    %310 = arith.addf %309, %308 : vector<2x256xf32>
    %311 = arith.divf %309, %310 : vector<2x256xf32>
    %312 = math.tanh %306 : vector<2x256xf32>
    %313 = vector.extract_strided_slice %311 {offsets = [0, 0], sizes = [2, 64], strides = [1, 1]} : vector<2x256xf32> to vector<2x64xf32>
    %314 = vector.extract_strided_slice %311 {offsets = [0, 64], sizes = [2, 64], strides = [1, 1]} : vector<2x256xf32> to vector<2x64xf32>
    %315 = vector.extract_strided_slice %312 {offsets = [0, 128], sizes = [2, 64], strides = [1, 1]} : vector<2x256xf32> to vector<2x64xf32>
    %316 = vector.extract_strided_slice %311 {offsets = [0, 192], sizes = [2, 64], strides = [1, 1]} : vector<2x256xf32> to vector<2x64xf32>
    %317 = arith.mulf %314, %298 : vector<2x64xf32>
    %318 = arith.mulf %313, %315 : vector<2x64xf32>
    %319 = arith.addf %317, %318 : vector<2x64xf32>
    %320 = math.tanh %319 : vector<2x64xf32>
    %321 = arith.mulf %316, %320 : vector<2x64xf32>
    %322 = vector.extract_strided_slice %235 {offsets = [8, 0], sizes = [2, 256], strides = [1, 1]} : vector<16x256xf32> to vector<2x256xf32>
    %323 = vector.extract_strided_slice %235 {offsets = [6, 0], sizes = [2, 256], strides = [1, 1]} : vector<16x256xf32> to vector<2x256xf32>
    %324 = arith.select %25, %322, %323 : vector<2x256xi1>, vector<2x256xf32>
    %325 = arith.truncf %321 : vector<2x64xf32> to vector<2x64xbf16>
    %cst_42 = arith.constant dense<0.000000e+00> : vector<2x256xf32>
    %326 = tpu.matmul %325, %229, %cst_42 {dimension_numbers = #tpu.dot_dimension_numbers<[1], [0], [0], [1], [0, 0, 1, 1], [], []>} : vector<2x64xbf16>, vector<64x256xbf16>, vector<2x256xf32> -> vector<2x256xf32>
    %327 = arith.addf %324, %326 : vector<2x256xf32>
    %328 = arith.negf %327 : vector<2x256xf32>
    %329 = math.exp %328 : vector<2x256xf32>
    %cst_43 = arith.constant 1.000000e+00 : f32
    %330 = vector.broadcast %cst_43 : f32 to vector<2x256xf32>
    %331 = arith.addf %330, %329 : vector<2x256xf32>
    %332 = arith.divf %330, %331 : vector<2x256xf32>
    %333 = math.tanh %327 : vector<2x256xf32>
    %334 = vector.extract_strided_slice %332 {offsets = [0, 0], sizes = [2, 64], strides = [1, 1]} : vector<2x256xf32> to vector<2x64xf32>
    %335 = vector.extract_strided_slice %332 {offsets = [0, 64], sizes = [2, 64], strides = [1, 1]} : vector<2x256xf32> to vector<2x64xf32>
    %336 = vector.extract_strided_slice %333 {offsets = [0, 128], sizes = [2, 64], strides = [1, 1]} : vector<2x256xf32> to vector<2x64xf32>
    %337 = vector.extract_strided_slice %332 {offsets = [0, 192], sizes = [2, 64], strides = [1, 1]} : vector<2x256xf32> to vector<2x64xf32>
    %338 = arith.mulf %335, %319 : vector<2x64xf32>
    %339 = arith.mulf %334, %336 : vector<2x64xf32>
    %340 = arith.addf %338, %339 : vector<2x64xf32>
    %341 = math.tanh %340 : vector<2x64xf32>
    %342 = arith.mulf %337, %341 : vector<2x64xf32>
    %343 = vector.extract_strided_slice %235 {offsets = [10, 0], sizes = [2, 256], strides = [1, 1]} : vector<16x256xf32> to vector<2x256xf32>
    %344 = vector.extract_strided_slice %235 {offsets = [4, 0], sizes = [2, 256], strides = [1, 1]} : vector<16x256xf32> to vector<2x256xf32>
    %345 = arith.select %25, %343, %344 : vector<2x256xi1>, vector<2x256xf32>
    %346 = arith.truncf %342 : vector<2x64xf32> to vector<2x64xbf16>
    %cst_44 = arith.constant dense<0.000000e+00> : vector<2x256xf32>
    %347 = tpu.matmul %346, %229, %cst_44 {dimension_numbers = #tpu.dot_dimension_numbers<[1], [0], [0], [1], [0, 0, 1, 1], [], []>} : vector<2x64xbf16>, vector<64x256xbf16>, vector<2x256xf32> -> vector<2x256xf32>
    %348 = arith.addf %345, %347 : vector<2x256xf32>
    %349 = arith.negf %348 : vector<2x256xf32>
    %350 = math.exp %349 : vector<2x256xf32>
    %cst_45 = arith.constant 1.000000e+00 : f32
    %351 = vector.broadcast %cst_45 : f32 to vector<2x256xf32>
    %352 = arith.addf %351, %350 : vector<2x256xf32>
    %353 = arith.divf %351, %352 : vector<2x256xf32>
    %354 = math.tanh %348 : vector<2x256xf32>
    %355 = vector.extract_strided_slice %353 {offsets = [0, 0], sizes = [2, 64], strides = [1, 1]} : vector<2x256xf32> to vector<2x64xf32>
    %356 = vector.extract_strided_slice %353 {offsets = [0, 64], sizes = [2, 64], strides = [1, 1]} : vector<2x256xf32> to vector<2x64xf32>
    %357 = vector.extract_strided_slice %354 {offsets = [0, 128], sizes = [2, 64], strides = [1, 1]} : vector<2x256xf32> to vector<2x64xf32>
    %358 = vector.extract_strided_slice %353 {offsets = [0, 192], sizes = [2, 64], strides = [1, 1]} : vector<2x256xf32> to vector<2x64xf32>
    %359 = arith.mulf %356, %340 : vector<2x64xf32>
    %360 = arith.mulf %355, %357 : vector<2x64xf32>
    %361 = arith.addf %359, %360 : vector<2x64xf32>
    %362 = math.tanh %361 : vector<2x64xf32>
    %363 = arith.mulf %358, %362 : vector<2x64xf32>
    %364 = vector.extract_strided_slice %235 {offsets = [12, 0], sizes = [2, 256], strides = [1, 1]} : vector<16x256xf32> to vector<2x256xf32>
    %365 = vector.extract_strided_slice %235 {offsets = [2, 0], sizes = [2, 256], strides = [1, 1]} : vector<16x256xf32> to vector<2x256xf32>
    %366 = arith.select %25, %364, %365 : vector<2x256xi1>, vector<2x256xf32>
    %367 = arith.truncf %363 : vector<2x64xf32> to vector<2x64xbf16>
    %cst_46 = arith.constant dense<0.000000e+00> : vector<2x256xf32>
    %368 = tpu.matmul %367, %229, %cst_46 {dimension_numbers = #tpu.dot_dimension_numbers<[1], [0], [0], [1], [0, 0, 1, 1], [], []>} : vector<2x64xbf16>, vector<64x256xbf16>, vector<2x256xf32> -> vector<2x256xf32>
    %369 = arith.addf %366, %368 : vector<2x256xf32>
    %370 = arith.negf %369 : vector<2x256xf32>
    %371 = math.exp %370 : vector<2x256xf32>
    %cst_47 = arith.constant 1.000000e+00 : f32
    %372 = vector.broadcast %cst_47 : f32 to vector<2x256xf32>
    %373 = arith.addf %372, %371 : vector<2x256xf32>
    %374 = arith.divf %372, %373 : vector<2x256xf32>
    %375 = math.tanh %369 : vector<2x256xf32>
    %376 = vector.extract_strided_slice %374 {offsets = [0, 0], sizes = [2, 64], strides = [1, 1]} : vector<2x256xf32> to vector<2x64xf32>
    %377 = vector.extract_strided_slice %374 {offsets = [0, 64], sizes = [2, 64], strides = [1, 1]} : vector<2x256xf32> to vector<2x64xf32>
    %378 = vector.extract_strided_slice %375 {offsets = [0, 128], sizes = [2, 64], strides = [1, 1]} : vector<2x256xf32> to vector<2x64xf32>
    %379 = vector.extract_strided_slice %374 {offsets = [0, 192], sizes = [2, 64], strides = [1, 1]} : vector<2x256xf32> to vector<2x64xf32>
    %380 = arith.mulf %377, %361 : vector<2x64xf32>
    %381 = arith.mulf %376, %378 : vector<2x64xf32>
    %382 = arith.addf %380, %381 : vector<2x64xf32>
    %383 = math.tanh %382 : vector<2x64xf32>
    %384 = arith.mulf %379, %383 : vector<2x64xf32>
    %385 = vector.extract_strided_slice %235 {offsets = [14, 0], sizes = [2, 256], strides = [1, 1]} : vector<16x256xf32> to vector<2x256xf32>
    %386 = vector.extract_strided_slice %235 {offsets = [0, 0], sizes = [2, 256], strides = [1, 1]} : vector<16x256xf32> to vector<2x256xf32>
    %387 = arith.select %25, %385, %386 : vector<2x256xi1>, vector<2x256xf32>
    %388 = arith.truncf %384 : vector<2x64xf32> to vector<2x64xbf16>
    %cst_48 = arith.constant dense<0.000000e+00> : vector<2x256xf32>
    %389 = tpu.matmul %388, %229, %cst_48 {dimension_numbers = #tpu.dot_dimension_numbers<[1], [0], [0], [1], [0, 0, 1, 1], [], []>} : vector<2x64xbf16>, vector<64x256xbf16>, vector<2x256xf32> -> vector<2x256xf32>
    %390 = arith.addf %387, %389 : vector<2x256xf32>
    %391 = arith.negf %390 : vector<2x256xf32>
    %392 = math.exp %391 : vector<2x256xf32>
    %cst_49 = arith.constant 1.000000e+00 : f32
    %393 = vector.broadcast %cst_49 : f32 to vector<2x256xf32>
    %394 = arith.addf %393, %392 : vector<2x256xf32>
    %395 = arith.divf %393, %394 : vector<2x256xf32>
    %396 = math.tanh %390 : vector<2x256xf32>
    %397 = vector.extract_strided_slice %395 {offsets = [0, 0], sizes = [2, 64], strides = [1, 1]} : vector<2x256xf32> to vector<2x64xf32>
    %398 = vector.extract_strided_slice %395 {offsets = [0, 64], sizes = [2, 64], strides = [1, 1]} : vector<2x256xf32> to vector<2x64xf32>
    %399 = vector.extract_strided_slice %396 {offsets = [0, 128], sizes = [2, 64], strides = [1, 1]} : vector<2x256xf32> to vector<2x64xf32>
    %400 = vector.extract_strided_slice %395 {offsets = [0, 192], sizes = [2, 64], strides = [1, 1]} : vector<2x256xf32> to vector<2x64xf32>
    %401 = arith.mulf %398, %382 : vector<2x64xf32>
    %402 = arith.mulf %397, %399 : vector<2x64xf32>
    %403 = arith.addf %401, %402 : vector<2x64xf32>
    %404 = math.tanh %403 : vector<2x64xf32>
    %405 = arith.mulf %400, %404 : vector<2x64xf32>
    %406 = vector.extract_strided_slice %258 {offsets = [0, 0], sizes = [2, 32], strides = [1, 1]} : vector<2x64xf32> to vector<2x32xf32>
    %407 = vector.extract_strided_slice %405 {offsets = [0, 32], sizes = [2, 32], strides = [1, 1]} : vector<2x64xf32> to vector<2x32xf32>
    %408 = tpu.concatenate %406, %407 in 1 : vector<2x32xf32>, vector<2x32xf32> -> vector<2x64xf32>
    %409 = vector.extract_strided_slice %279 {offsets = [0, 0], sizes = [2, 32], strides = [1, 1]} : vector<2x64xf32> to vector<2x32xf32>
    %410 = vector.extract_strided_slice %384 {offsets = [0, 32], sizes = [2, 32], strides = [1, 1]} : vector<2x64xf32> to vector<2x32xf32>
    %411 = tpu.concatenate %409, %410 in 1 : vector<2x32xf32>, vector<2x32xf32> -> vector<2x64xf32>
    %412 = vector.extract_strided_slice %300 {offsets = [0, 0], sizes = [2, 32], strides = [1, 1]} : vector<2x64xf32> to vector<2x32xf32>
    %413 = vector.extract_strided_slice %363 {offsets = [0, 32], sizes = [2, 32], strides = [1, 1]} : vector<2x64xf32> to vector<2x32xf32>
    %414 = tpu.concatenate %412, %413 in 1 : vector<2x32xf32>, vector<2x32xf32> -> vector<2x64xf32>
    %415 = vector.extract_strided_slice %321 {offsets = [0, 0], sizes = [2, 32], strides = [1, 1]} : vector<2x64xf32> to vector<2x32xf32>
    %416 = vector.extract_strided_slice %342 {offsets = [0, 32], sizes = [2, 32], strides = [1, 1]} : vector<2x64xf32> to vector<2x32xf32>
    %417 = tpu.concatenate %415, %416 in 1 : vector<2x32xf32>, vector<2x32xf32> -> vector<2x64xf32>
    %418 = vector.extract_strided_slice %342 {offsets = [0, 0], sizes = [2, 32], strides = [1, 1]} : vector<2x64xf32> to vector<2x32xf32>
    %419 = vector.extract_strided_slice %321 {offsets = [0, 32], sizes = [2, 32], strides = [1, 1]} : vector<2x64xf32> to vector<2x32xf32>
    %420 = tpu.concatenate %418, %419 in 1 : vector<2x32xf32>, vector<2x32xf32> -> vector<2x64xf32>
    %421 = vector.extract_strided_slice %363 {offsets = [0, 0], sizes = [2, 32], strides = [1, 1]} : vector<2x64xf32> to vector<2x32xf32>
    %422 = vector.extract_strided_slice %300 {offsets = [0, 32], sizes = [2, 32], strides = [1, 1]} : vector<2x64xf32> to vector<2x32xf32>
    %423 = tpu.concatenate %421, %422 in 1 : vector<2x32xf32>, vector<2x32xf32> -> vector<2x64xf32>
    %424 = vector.extract_strided_slice %384 {offsets = [0, 0], sizes = [2, 32], strides = [1, 1]} : vector<2x64xf32> to vector<2x32xf32>
    %425 = vector.extract_strided_slice %279 {offsets = [0, 32], sizes = [2, 32], strides = [1, 1]} : vector<2x64xf32> to vector<2x32xf32>
    %426 = tpu.concatenate %424, %425 in 1 : vector<2x32xf32>, vector<2x32xf32> -> vector<2x64xf32>
    %427 = vector.extract_strided_slice %405 {offsets = [0, 0], sizes = [2, 32], strides = [1, 1]} : vector<2x64xf32> to vector<2x32xf32>
    %428 = vector.extract_strided_slice %258 {offsets = [0, 32], sizes = [2, 32], strides = [1, 1]} : vector<2x64xf32> to vector<2x32xf32>
    %429 = tpu.concatenate %427, %428 in 1 : vector<2x32xf32>, vector<2x32xf32> -> vector<2x64xf32>
    %430 = arith.maximumf %408, %411 : vector<2x64xf32>
    %431 = arith.maximumf %430, %414 : vector<2x64xf32>
    %432 = arith.maximumf %431, %417 : vector<2x64xf32>
    %433 = arith.maximumf %432, %420 : vector<2x64xf32>
    %434 = arith.maximumf %433, %423 : vector<2x64xf32>
    %435 = arith.maximumf %434, %426 : vector<2x64xf32>
    %436 = arith.maximumf %435, %429 : vector<2x64xf32>
    %cst_50 = arith.constant 0.000000e+00 : f32
    %437 = vector.broadcast %cst_50 : f32 to vector<2x64xf32>
    %438 = arith.maximumf %436, %437 : vector<2x64xf32>
    %439 = vector.extract_strided_slice %26 {offsets = [0, 0], sizes = [2, 32], strides = [1, 1]} : vector<16x32xf32> to vector<2x32xf32>
    %440 = vector.extract_strided_slice %26 {offsets = [2, 0], sizes = [2, 32], strides = [1, 1]} : vector<16x32xf32> to vector<2x32xf32>
    %441 = arith.maximumf %439, %440 : vector<2x32xf32>
    %442 = vector.extract_strided_slice %26 {offsets = [4, 0], sizes = [2, 32], strides = [1, 1]} : vector<16x32xf32> to vector<2x32xf32>
    %443 = arith.maximumf %441, %442 : vector<2x32xf32>
    %444 = vector.extract_strided_slice %26 {offsets = [6, 0], sizes = [2, 32], strides = [1, 1]} : vector<16x32xf32> to vector<2x32xf32>
    %445 = arith.maximumf %443, %444 : vector<2x32xf32>
    %446 = vector.extract_strided_slice %26 {offsets = [8, 0], sizes = [2, 32], strides = [1, 1]} : vector<16x32xf32> to vector<2x32xf32>
    %447 = arith.maximumf %445, %446 : vector<2x32xf32>
    %448 = vector.extract_strided_slice %26 {offsets = [10, 0], sizes = [2, 32], strides = [1, 1]} : vector<16x32xf32> to vector<2x32xf32>
    %449 = arith.maximumf %447, %448 : vector<2x32xf32>
    %450 = vector.extract_strided_slice %26 {offsets = [12, 0], sizes = [2, 32], strides = [1, 1]} : vector<16x32xf32> to vector<2x32xf32>
    %451 = arith.maximumf %449, %450 : vector<2x32xf32>
    %452 = vector.extract_strided_slice %26 {offsets = [14, 0], sizes = [2, 32], strides = [1, 1]} : vector<16x32xf32> to vector<2x32xf32>
    %453 = arith.maximumf %451, %452 : vector<2x32xf32>
    %cst_51 = arith.constant 0.000000e+00 : f32
    %454 = vector.broadcast %cst_51 : f32 to vector<2x32xf32>
    %455 = arith.maximumf %453, %454 : vector<2x32xf32>
    %456 = tpu.concatenate %438, %455 in 1 : vector<2x64xf32>, vector<2x32xf32> -> vector<2x96xf32>
    %457 = arith.truncf %456 : vector<2x96xf32> to vector<2x96xbf16>
    %c0_52 = arith.constant 0 : index
    %c0_53 = arith.constant 0 : index
    %458 = vector.load %arg7[%c0_52, %c0_53] : memref<96x128xbf16, #tpu.memory_space<vmem>>, vector<96x128xbf16>
    %cst_54 = arith.constant dense<0.000000e+00> : vector<2x128xf32>
    %459 = tpu.matmul %457, %458, %cst_54 {dimension_numbers = #tpu.dot_dimension_numbers<[1], [0], [0], [1], [0, 0, 1, 1], [], []>} : vector<2x96xbf16>, vector<96x128xbf16>, vector<2x128xf32> -> vector<2x128xf32>
    %c0_55 = arith.constant 0 : index
    %c0_56 = arith.constant 0 : index
    %460 = vector.load %arg8[%c0_55, %c0_56] : memref<1x128xf32, #tpu.memory_space<vmem>>, vector<1x128xf32>
    %461 = vector.broadcast %460 : vector<1x128xf32> to vector<2x128xf32>
    %462 = arith.addf %459, %461 : vector<2x128xf32>
    %cst_57 = arith.constant dense<0xFF800000> : vector<2xf32>
    %463 = vector.multi_reduction <maximumf>, %462, %cst_57 [1] : vector<2x128xf32> to vector<2xf32>
    %464 = vector.shape_cast %463 : vector<2xf32> to vector<2x1xf32>
    %465 = vector.broadcast %464 : vector<2x1xf32> to vector<2x128xf32>
    %466 = arith.subf %462, %465 : vector<2x128xf32>
    %467 = math.exp %466 : vector<2x128xf32>
    %cst_58 = arith.constant dense<0.000000e+00> : vector<2xf32>
    %468 = vector.multi_reduction <add>, %467, %cst_58 [1] : vector<2x128xf32> to vector<2xf32>
    %469 = vector.shape_cast %468 : vector<2xf32> to vector<2x1xf32>
    %470 = tpu.reciprocal %469 {approx = true} : vector<2x1xf32> -> vector<2x1xf32>
    %471 = vector.broadcast %470 : vector<2x1xf32> to vector<2x128xf32>
    %472 = arith.mulf %467, %471 : vector<2x128xf32>
    %c0_59 = arith.constant 0 : index
    %c0_60 = arith.constant 0 : index
    %473 = vector.load %arg9[%c0_59, %c0_60] : memref<2x128xf32, #tpu.memory_space<vmem>>, vector<2x128xf32>
    tpu.vector_store %arg9[%c0_59, %c0_60], %472 {strides = array<i32>} : memref<2x128xf32, #tpu.memory_space<vmem>>, vector<2x128xf32>,
    return
  }
}

</mosaic_0001>

<llo_original>
// kernel: model_forward.1
$region0: #{model_forward.1}
  #allocation0 [shape = 'u32[]', space=smem, size = 0x4, offset = 0x4, fixed_abs, tag = 'smem constant byte address 0x4 - core index']
  #allocation1 [shape = 'u32[144,128]{1,0:T(1,128)}', space=vmem, size = 0x12000, scoped, tag = 'internal scratch']
  %s0 = inlined_call_operand.vmem [shape: f32[16,32], index: 0, kind: input, shape index: {}]
  %s1 = inlined_call_operand.vmem [shape: bf16[32,256], index: 1, kind: input, shape index: {}]
  %s2 = inlined_call_operand.vmem [shape: bf16[64,256], index: 2, kind: input, shape index: {}]
  %s3 = inlined_call_operand.vmem [shape: f32[1,256], index: 3, kind: input, shape index: {}]
  %s4 = inlined_call_operand.vmem [shape: bf16[64,256], index: 4, kind: input, shape index: {}]
  %s5 = inlined_call_operand.vmem [shape: bf16[64,256], index: 5, kind: input, shape index: {}]
  %s6 = inlined_call_operand.vmem [shape: f32[1,256], index: 6, kind: input, shape index: {}]
  %s7 = inlined_call_operand.vmem [shape: bf16[96,128], index: 7, kind: input, shape index: {}]
  %s8 = inlined_call_operand.hbm [shape: f32[1,128], index: 8, kind: input, shape index: {}]
  %s9 = inlined_call_operand.hbm [shape: f32[2,128], index: 9, kind: output, shape index: {}]
  %s10 = sld [smem:[#allocation0]]
  $region50: #{model_forward.1} parent=0
    _
  %s12 = ssub.s32 1, %s10
  %s13 = scalar_select 0, %s12, %s10
  $region1: #{model_forward.1} parent=0
    #allocation2 [shape = 'u8[512]{0}', space=vmem, size = 0x400, scoped, tag = 'input window, operand 8, single buffered']
    #allocation3 [shape = 's32[1]{0}', space=sflag, size = 0x4, scoped, tag = 'scoped memory for model_forward.1']
    #allocation4 [shape = 's32[1]{0}', space=sflag, size = 0x4, scoped, tag = 'scoped memory for model_forward.1']
    #allocation5 [shape = 'u8[1024]{0}', space=vmem, size = 0x400, scoped, tag = 'output window, operand 0, single buffered']
    %14 = vsyncpa [#allocation3], 0
    %15 = vsyncpa [#allocation4], 0
    // Predicated region
    $region2: #{model_forward.1} parent=1 // pred_check
      _
    $region3: #{model_forward.1} parent=1 // pred_check_branch
      %17 = sbr.rel (0) target = $region5
    $region4: #{model_forward.1} parent=1 // pred_region
      _
    $region5: #{model_forward.1} parent=1 // pred_fallthru
      _
    // Predicated region
    $region6: #{model_forward.1} parent=1 // pred_check
      _
    $region7: #{model_forward.1} parent=1 // pred_check_branch
      %19 = sbr.rel (0) target = $region9
    $region8: #{model_forward.1} parent=1 // pred_region
      _
    $region9: #{model_forward.1} parent=1 // pred_fallthru
      _
    // Predicated region
    $region10: #{model_forward.1} parent=1 // pred_check
      _
    $region11: #{model_forward.1} parent=1 // pred_check_branch
      %21 = sbr.rel (0) target = $region13
    $region12: #{model_forward.1} parent=1 // pred_region
      _
    $region13: #{model_forward.1} parent=1 // pred_fallthru
      _
    // Predicated region
    $region14: #{model_forward.1} parent=1 // pred_check
      _
    $region15: #{model_forward.1} parent=1 // pred_check_branch
      %23 = sbr.rel (0) target = $region17
    $region16: #{model_forward.1} parent=1 // pred_region
      _
    $region17: #{model_forward.1} parent=1 // pred_fallthru
      _
    // Predicated region
    $region18: #{model_forward.1} parent=1 // pred_check
      _
    $region19: #{model_forward.1} parent=1 // pred_check_branch
      %25 = sbr.rel (0) target = $region21
    $region20: #{model_forward.1} parent=1 // pred_region
      _
    $region21: #{model_forward.1} parent=1 // pred_fallthru
      _
    // Predicated region
    $region22: #{model_forward.1} parent=1 // pred_check
      _
    $region23: #{model_forward.1} parent=1 // pred_check_branch
      %27 = sbr.rel (0) target = $region25
    $region24: #{model_forward.1} parent=1 // pred_region
      _
    $region25: #{model_forward.1} parent=1 // pred_fallthru
      _
    // Predicated region
    $region26: #{model_forward.1} parent=1 // pred_check
      _
    $region27: #{model_forward.1} parent=1 // pred_check_branch
      %29 = sbr.rel (0) target = $region29
    $region28: #{model_forward.1} parent=1 // pred_region
      _
    $region29: #{model_forward.1} parent=1 // pred_fallthru
      _
    // Predicated region
    $region30: #{model_forward.1} parent=1 // pred_check
      _
    $region31: #{model_forward.1} parent=1 // pred_check_branch
      %31 = sbr.rel (0) target = $region33
    $region32: #{model_forward.1} parent=1 // pred_region
      _
    $region33: #{model_forward.1} parent=1 // pred_fallthru
      _
    // Predicated region
    $region34: #{model_forward.1} parent=1 // pred_check
      _
    $region35: #{model_forward.1} parent=1 // pred_check_branch
      %33 = sbr.rel (0) target = $region37
    $region36: #{model_forward.1} parent=1 // pred_region
      %s35 = ssub.s32 16, 16
      %36 = vsyncadd [#allocation3], %s35
      %s38 = sshll.u32 [#allocation2], 4
      %s39 = int_to_ptr.vmem [resolvable:$true] %s38
      %41 = dma.hbm_to_vmem [thread:$0]  %s8, 16, %s39, [#allocation3]
    $region37: #{model_forward.1} parent=1 // pred_fallthru
      _
    // Predicated region
    $region38: #{model_forward.1} parent=1 // pred_check
      _
    $region39: #{model_forward.1} parent=1 // pred_check_branch
      %43 = sbr.rel (0) target = $region41
    $region40: #{model_forward.1} parent=1 // pred_region
      %44 = dma.done [#allocation3], 16
    $region41: #{model_forward.1} parent=1 // pred_fallthru
      _
    %v46 = vlaneseq
    %v47 = vand.u32 %v46, 127
    %v48 = vadd.s32 %v47, 128
    %vm49 = vcmp.ge.s32.totalorder %v47, 0
    %vm50 = vcmp.ge.s32.totalorder %v48, 0
    %vm51 = vcmp.lt.s32.totalorder %v47, 32
    %vm52 = vcmp.lt.s32.totalorder %v48, 32
    %vm53 = vmand %vm49, %vm51
    %vm54 = vmand %vm50, %vm52
    %vm55 = vcmp.ge.s32.totalorder %v47, 64
    %vm56 = vcmp.ge.s32.totalorder %v48, 64
    %vm57 = vcmp.lt.s32.totalorder %v47, 96
    %vm58 = vcmp.lt.s32.totalorder %v48, 96
    %vm59 = vmand %vm55, %vm57
    %vm60 = vmand %vm56, %vm58
    %vm61 = vmor %vm53, %vm59
    %vm62 = vmor %vm54, %vm60
    %vm63 = vcmp.ge.s32.totalorder %v47, 128
    %vm64 = vcmp.ge.s32.totalorder %v48, 128
    %vm65 = vcmp.lt.s32.totalorder %v47, 160
    %vm66 = vcmp.lt.s32.totalorder %v48, 160
    %vm67 = vmand %vm63, %vm65
    %vm68 = vmand %vm64, %vm66
    %vm69 = vmor %vm61, %vm67
    %vm70 = vmor %vm62, %vm68
    %vm71 = vcmp.ge.s32.totalorder %v47, 192
    %vm72 = vcmp.ge.s32.totalorder %v48, 192
    %vm73 = vcmp.lt.s32.totalorder %v47, 224
    %vm74 = vcmp.lt.s32.totalorder %v48, 224
    %vm75 = vmand %vm71, %vm73
    %vm76 = vmand %vm72, %vm74
    %vm77 = vmor %vm69, %vm75
    %vm78 = vmor %vm70, %vm76
    %v79 = vld [vmem:[%s0] sm:$0xff]
    %v80 = vld [vmem:[%s0 + $0x8] sm:$0xff]
    %v81 = vld [vmem:[%s2] sm:$0xff]
    %v82 = vld [vmem:[%s2 + $0x8] sm:$0xff]
    %v83 = vld [vmem:[%s2 + $0x10] sm:$0xff]
    %v84 = vld [vmem:[%s2 + $0x18] sm:$0xff]
    %v85 = vld [vmem:[%s2 + $0x20] sm:$0xff]
    %v86 = vld [vmem:[%s2 + $0x28] sm:$0xff]
    %v87 = vld [vmem:[%s2 + $0x30] sm:$0xff]
    %v88 = vld [vmem:[%s2 + $0x38] sm:$0xff]
    %v89 = vpack.c.bf16 %v80, %v79
    %v90 = vld [vmem:[%s1] sm:$0xff]
    %v91 = vld [vmem:[%s1 + $0x8] sm:$0xff]
    %v92 = vld [vmem:[%s1 + $0x10] sm:$0xff]
    %v93 = vld [vmem:[%s1 + $0x18] sm:$0xff]
    %v94 = vld [vmem:[%s3] sm:$0x3]
    %v96 = vlaneseq
    %v97 = vshrl.u32 %v96, 7
    %v98 = vsub.s32 0, %v97
    %v99 = vrot.slane %v94, %v98
    %v100 = vlaneseq
    %v101 = vshrl.u32 %v100, 7
    %v102 = vsub.s32 1, %v101
    %v103 = vrot.slane %v94, %v102
    %v110 = vunpack.c.l.b16 %v90
    %v111 = vunpack.c.h.b16 %v90
    %v112 = vunpack.c.l.b16 %v91
    %v113 = vunpack.c.h.b16 %v91
    %v114 = vunpack.c.l.b16 %v92
    %v115 = vunpack.c.h.b16 %v92
    %v116 = vunpack.c.l.b16 %v93
    %v117 = vunpack.c.h.b16 %v93
    %v118 = vpack.c.b16 %v112, %v110
    %v119 = vpack.c.b16 %v113, %v111
    %v120 = vpack.c.b16 %v116, %v114
    %v121 = vpack.c.b16 %v117, %v115
    %vm126 = vcmask 261120
    %v128 = vsel %vm126, %v89, 0
    %130 = vmatprep.subr.bf16.mxu0 %v119
    %131 = vmatpush1.bf16.msra.mxu0 %v118
    %132 = vmatprep.subr.bf16.mxu0 %v121
    %133 = vmatpush1.bf16.msra.mxu0 %v120
    %134 = vmatprep.subr.bf16.mxu0 0
    %135 = vmatpush1.bf16.msra.mxu0 0
    %136 = vmatprep.subr.bf16.mxu0 0
    %137 = vmatpush1.bf16.msra.mxu0 0
    %138 = vmatprep.subr.bf16.mxu0 0
    %139 = vmatpush1.bf16.msra.mxu0 0
    %140 = vmatprep.subr.bf16.mxu0 0
    %141 = vmatpush1.bf16.msra.mxu0 0
    %142 = vmatprep.subr.bf16.mxu0 0
    %143 = vmatpush1.bf16.msra.mxu0 0
    %144 = vmatprep.subr.bf16.mxu0 0
    %145 = vmatpush1.bf16.msra.mxu0 0
    %146 = vmatprep.subr.bf16.mxu0 0
    %147 = vmatpush1.bf16.msra.mxu0 0
    %148 = vmatprep.subr.bf16.mxu0 0
    %149 = vmatpush1.bf16.msra.mxu0 0
    %150 = vmatprep.subr.bf16.mxu0 0
    %151 = vmatpush1.bf16.msra.mxu0 0
    %152 = vmatprep.subr.bf16.mxu0 0
    %153 = vmatpush1.bf16.msra.mxu0 0
    %154 = vmatprep.subr.bf16.mxu0 0
    %155 = vmatpush1.bf16.msra.mxu0 0
    %156 = vmatprep.subr.bf16.mxu0 0
    %157 = vmatpush1.bf16.msra.mxu0 0
    %158 = vmatprep.subr.bf16.mxu0 0
    %159 = vmatpush1.bf16.msra.mxu0 0
    %160 = vmatprep.subr.bf16.mxu0 0
    %161 = vmatpush1.bf16.msra.mxu0 0
    %162 = vmatprep.mubr.bf16.mxu0 0
    %163 = vmatmul.mubr.bf16.gmra.mrb[0].mxu0 %v128
    %v164 = vpop.f32.mrb[0].mxu0
    %v165 = vadd.f32 %v99, %v164
    %v166 = vpop.f32.mrb[0].mxu0
    %v167 = vadd.f32 %v103, %v166
    %v168 = vpop.f32.mrb[0].mxu0
    %v169 = vadd.f32 %v99, %v168
    %v170 = vpop.f32.mrb[0].mxu0
    %v171 = vadd.f32 %v103, %v170
    %172 = vdwg.mxu0
    %v175 = vrot.slane %v169, 6
    %v176 = vrot.slane %v171, 6
    %v179 = vsel %vm77, %v165, %v175
    %v180 = vsel %vm78, %v167, %v176
    %v189 = vunpack.c.l.b16 %v81
    %v190 = vunpack.c.h.b16 %v81
    %v191 = vunpack.c.l.b16 %v82
    %v192 = vunpack.c.h.b16 %v82
    %v193 = vunpack.c.l.b16 %v83
    %v194 = vunpack.c.h.b16 %v83
    %v195 = vunpack.c.l.b16 %v84
    %v196 = vunpack.c.h.b16 %v84
    %v197 = vunpack.c.l.b16 %v85
    %v198 = vunpack.c.h.b16 %v85
    %v199 = vunpack.c.l.b16 %v86
    %v200 = vunpack.c.h.b16 %v86
    %v201 = vunpack.c.l.b16 %v87
    %v202 = vunpack.c.h.b16 %v87
    %v203 = vunpack.c.l.b16 %v88
    %v204 = vunpack.c.h.b16 %v88
    %v205 = vpack.c.b16 %v191, %v189
    %v206 = vpack.c.b16 %v192, %v190
    %v207 = vpack.c.b16 %v195, %v193
    %v208 = vpack.c.b16 %v196, %v194
    %v209 = vpack.c.b16 %v199, %v197
    %v210 = vpack.c.b16 %v200, %v198
    %v211 = vpack.c.b16 %v203, %v201
    %v212 = vpack.c.b16 %v204, %v202
    %vm221 = vcmask 523264
    %v223 = vsel %vm221, 0, 0
    %225 = vmatprep.subr.bf16.mxu0 %v206
    %226 = vmatpush1.bf16.msra.mxu0 %v205
    %227 = vmatprep.subr.bf16.mxu0 %v208
    %228 = vmatpush1.bf16.msra.mxu0 %v207
    %229 = vmatprep.subr.bf16.mxu0 %v210
    %230 = vmatpush1.bf16.msra.mxu0 %v209
    %231 = vmatprep.subr.bf16.mxu0 %v212
    %232 = vmatpush1.bf16.msra.mxu0 %v211
    %233 = vmatprep.subr.bf16.mxu0 0
    %234 = vmatpush1.bf16.msra.mxu0 0
    %235 = vmatprep.subr.bf16.mxu0 0
    %236 = vmatpush1.bf16.msra.mxu0 0
    %237 = vmatprep.subr.bf16.mxu0 0
    %238 = vmatpush1.bf16.msra.mxu0 0
    %239 = vmatprep.subr.bf16.mxu0 0
    %240 = vmatpush1.bf16.msra.mxu0 0
    %241 = vmatprep.subr.bf16.mxu0 0
    %242 = vmatpush1.bf16.msra.mxu0 0
    %243 = vmatprep.subr.bf16.mxu0 0
    %244 = vmatpush1.bf16.msra.mxu0 0
    %245 = vmatprep.subr.bf16.mxu0 0
    %246 = vmatpush1.bf16.msra.mxu0 0
    %247 = vmatprep.subr.bf16.mxu0 0
    %248 = vmatpush1.bf16.msra.mxu0 0
    %249 = vmatprep.subr.bf16.mxu0 0
    %250 = vmatpush1.bf16.msra.mxu0 0
    %251 = vmatprep.subr.bf16.mxu0 0
    %252 = vmatpush1.bf16.msra.mxu0 0
    %253 = vmatprep.subr.bf16.mxu0 0
    %254 = vmatpush1.bf16.msra.mxu0 0
    %255 = vmatprep.subr.bf16.mxu0 0
    %256 = vmatpush1.bf16.msra.mxu0 0
    %257 = vmatprep.mubr.bf16.mxu0 0
    %258 = vmatmul.mubr.bf16.gmra.mrb[0].mxu0 %v223
    %v259 = vpop.f32.mrb[0].mxu0
    %v260 = vadd.f32 0.0, %v259
    %v261 = vpop.f32.mrb[0].mxu0
    %v262 = vadd.f32 0.0, %v261
    %v263 = vpop.f32.mrb[0].mxu0
    %v264 = vpop.f32.mrb[0].mxu0
    %265 = vdwg.mxu0
    %v266 = vadd.f32 %v179, %v260
    %v267 = vadd.f32 %v180, %v262
    %v268 = vxor.u32 %v266, 2147483648
    %v269 = vxor.u32 %v267, 2147483648
    %v270 = vmul.f32 %v268, 1.442695
    %v271 = vpow.pop %v270
    %v272 = vmul.f32 %v269, 1.442695
    %v273 = vpow.pop %v272
    %v274 = vadd.f32 %v271, 1.0
    %v275 = vadd.f32 %v273, 1.0
    %v276 = vrcp.pop %v274
    %v277 = vmul.f32 1.0, %v276
    %v278 = vrcp.pop %v275
    %v279 = vmul.f32 1.0, %v278
    %v280 = vtanh.pop %v267
    %v281 = vmul.f32 %v277, 0.0
    %v282 = vmul.f32 %v277, %v280
    %284 = vrot.lane.b32.xlu0 %v282, 64
    %v285 = vpop.permute.xlu0 %284
    %v287 = vadd.f32 %v281, %v285
    %v288 = vtanh.pop %v287
    %v289 = vmul.f32 %v279, %v288
    %v290 = vrot.slane %v169, 2
    %v291 = vrot.slane %v171, 2
    %v294 = vsel %vm77, %v165, %v290
    %v295 = vsel %vm78, %v167, %v291
    %v296 = vpack.c.bf16 %v289, %v289
    %298 = vrot.lane.b32.xlu0 %v296, 64
    %v299 = vpop.permute.xlu0 %298
    %v301 = vsel %vm221, %v299, 0
    %303 = vmatprep.subr.bf16.mxu0 %v206
    %304 = vmatpush1.bf16.msra.mxu0 %v205
    %305 = vmatprep.subr.bf16.mxu0 %v208
    %306 = vmatpush1.bf16.msra.mxu0 %v207
    %307 = vmatprep.subr.bf16.mxu0 %v210
    %308 = vmatpush1.bf16.msra.mxu0 %v209
    %309 = vmatprep.subr.bf16.mxu0 %v212
    %310 = vmatpush1.bf16.msra.mxu0 %v211
    %311 = vmatprep.subr.bf16.mxu0 0
    %312 = vmatpush1.bf16.msra.mxu0 0
    %313 = vmatprep.subr.bf16.mxu0 0
    %314 = vmatpush1.bf16.msra.mxu0 0
    %315 = vmatprep.subr.bf16.mxu0 0
    %316 = vmatpush1.bf16.msra.mxu0 0
    %317 = vmatprep.subr.bf16.mxu0 0
    %318 = vmatpush1.bf16.msra.mxu0 0
    %319 = vmatprep.subr.bf16.mxu0 0
    %320 = vmatpush1.bf16.msra.mxu0 0
    %321 = vmatprep.subr.bf16.mxu0 0
    %322 = vmatpush1.bf16.msra.mxu0 0
    %323 = vmatprep.subr.bf16.mxu0 0
    %324 = vmatpush1.bf16.msra.mxu0 0
    %325 = vmatprep.subr.bf16.mxu0 0
    %326 = vmatpush1.bf16.msra.mxu0 0
    %327 = vmatprep.subr.bf16.mxu0 0
    %328 = vmatpush1.bf16.msra.mxu0 0
    %329 = vmatprep.subr.bf16.mxu0 0
    %330 = vmatpush1.bf16.msra.mxu0 0
    %331 = vmatprep.subr.bf16.mxu0 0
    %332 = vmatpush1.bf16.msra.mxu0 0
    %333 = vmatprep.subr.bf16.mxu0 0
    %334 = vmatpush1.bf16.msra.mxu0 0
    %335 = vmatprep.mubr.bf16.mxu0 0
    %336 = vmatmul.mubr.bf16.gmra.mrb[0].mxu0 %v301
    %v337 = vpop.f32.mrb[0].mxu0
    %v338 = vadd.f32 0.0, %v337
    %v339 = vpop.f32.mrb[0].mxu0
    %v340 = vadd.f32 0.0, %v339
    %v341 = vpop.f32.mrb[0].mxu0
    %v342 = vpop.f32.mrb[0].mxu0
    %343 = vdwg.mxu0
    %v346 = vrot.slane %v338, 6
    %v347 = vrot.slane %v340, 6
    %v350 = vadd.f32 %v294, %v346
    %v351 = vadd.f32 %v295, %v347
    %v352 = vxor.u32 %v350, 2147483648
    %v353 = vxor.u32 %v351, 2147483648
    %v354 = vmul.f32 %v352, 1.442695
    %v355 = vpow.pop %v354
    %v356 = vmul.f32 %v353, 1.442695
    %v357 = vpow.pop %v356
    %v358 = vadd.f32 %v355, 1.0
    %v359 = vadd.f32 %v357, 1.0
    %v360 = vrcp.pop %v358
    %v361 = vmul.f32 1.0, %v360
    %v362 = vrcp.pop %v359
    %v363 = vmul.f32 1.0, %v362
    %v364 = vtanh.pop %v351
    %v366 = vrot.slane %v287, 6
    %v368 = vmul.f32 %v361, %v366
    %v369 = vmul.f32 %v361, %v364
    %371 = vrot.lane.b32.xlu0 %v369, 64
    %v372 = vpop.permute.xlu0 %371
    %v374 = vadd.f32 %v368, %v372
    %v375 = vtanh.pop %v374
    %v376 = vmul.f32 %v363, %v375
    %v377 = vpack.c.bf16 %v376, %v376
    %v379 = vrot.slane %v377, 1
    %380 = vrot.lane.b32.xlu0 %v379, 64
    %v381 = vpop.permute.xlu0 %380
    %v383 = vsel %vm221, %v381, 0
    %385 = vmatprep.subr.bf16.mxu0 %v206
    %386 = vmatpush1.bf16.msra.mxu0 %v205
    %387 = vmatprep.subr.bf16.mxu0 %v208
    %388 = vmatpush1.bf16.msra.mxu0 %v207
    %389 = vmatprep.subr.bf16.mxu0 %v210
    %390 = vmatpush1.bf16.msra.mxu0 %v209
    %391 = vmatprep.subr.bf16.mxu0 %v212
    %392 = vmatpush1.bf16.msra.mxu0 %v211
    %393 = vmatprep.subr.bf16.mxu0 0
    %394 = vmatpush1.bf16.msra.mxu0 0
    %395 = vmatprep.subr.bf16.mxu0 0
    %396 = vmatpush1.bf16.msra.mxu0 0
    %397 = vmatprep.subr.bf16.mxu0 0
    %398 = vmatpush1.bf16.msra.mxu0 0
    %399 = vmatprep.subr.bf16.mxu0 0
    %400 = vmatpush1.bf16.msra.mxu0 0
    %401 = vmatprep.subr.bf16.mxu0 0
    %402 = vmatpush1.bf16.msra.mxu0 0
    %403 = vmatprep.subr.bf16.mxu0 0
    %404 = vmatpush1.bf16.msra.mxu0 0
    %405 = vmatprep.subr.bf16.mxu0 0
    %406 = vmatpush1.bf16.msra.mxu0 0
    %407 = vmatprep.subr.bf16.mxu0 0
    %408 = vmatpush1.bf16.msra.mxu0 0
    %409 = vmatprep.subr.bf16.mxu0 0
    %410 = vmatpush1.bf16.msra.mxu0 0
    %411 = vmatprep.subr.bf16.mxu0 0
    %412 = vmatpush1.bf16.msra.mxu0 0
    %413 = vmatprep.subr.bf16.mxu0 0
    %414 = vmatpush1.bf16.msra.mxu0 0
    %415 = vmatprep.subr.bf16.mxu0 0
    %416 = vmatpush1.bf16.msra.mxu0 0
    %417 = vmatprep.mubr.bf16.mxu0 0
    %418 = vmatmul.mubr.bf16.gmra.mrb[0].mxu0 %v383
    %v419 = vpop.f32.mrb[0].mxu0
    %v420 = vadd.f32 0.0, %v419
    %v421 = vpop.f32.mrb[0].mxu0
    %v422 = vadd.f32 0.0, %v421
    %v423 = vpop.f32.mrb[0].mxu0
    %v424 = vpop.f32.mrb[0].mxu0
    %425 = vdwg.mxu0
    %v428 = vrot.slane %v420, 4
    %v429 = vrot.slane %v422, 4
    %v432 = vadd.f32 %v179, %v428
    %v433 = vadd.f32 %v180, %v429
    %v434 = vxor.u32 %v432, 2147483648
    %v435 = vxor.u32 %v433, 2147483648
    %v436 = vmul.f32 %v434, 1.442695
    %v437 = vpow.pop %v436
    %v438 = vmul.f32 %v435, 1.442695
    %v439 = vpow.pop %v438
    %v440 = vadd.f32 %v437, 1.0
    %v441 = vadd.f32 %v439, 1.0
    %v442 = vrcp.pop %v440
    %v443 = vmul.f32 1.0, %v442
    %v444 = vrcp.pop %v441
    %v445 = vmul.f32 1.0, %v444
    %v446 = vtanh.pop %v433
    %v448 = vrot.slane %v374, 6
    %v450 = vmul.f32 %v443, %v448
    %v451 = vmul.f32 %v443, %v446
    %453 = vrot.lane.b32.xlu0 %v451, 64
    %v454 = vpop.permute.xlu0 %453
    %v456 = vadd.f32 %v450, %v454
    %v457 = vtanh.pop %v456
    %v458 = vmul.f32 %v445, %v457
    %v459 = vpack.c.bf16 %v458, %v458
    %v461 = vrot.slane %v459, 2
    %462 = vrot.lane.b32.xlu0 %v461, 64
    %v463 = vpop.permute.xlu0 %462
    %v465 = vsel %vm221, %v463, 0
    %467 = vmatprep.subr.bf16.mxu0 %v206
    %468 = vmatpush1.bf16.msra.mxu0 %v205
    %469 = vmatprep.subr.bf16.mxu0 %v208
    %470 = vmatpush1.bf16.msra.mxu0 %v207
    %471 = vmatprep.subr.bf16.mxu0 %v210
    %472 = vmatpush1.bf16.msra.mxu0 %v209
    %473 = vmatprep.subr.bf16.mxu0 %v212
    %474 = vmatpush1.bf16.msra.mxu0 %v211
    %475 = vmatprep.subr.bf16.mxu0 0
    %476 = vmatpush1.bf16.msra.mxu0 0
    %477 = vmatprep.subr.bf16.mxu0 0
    %478 = vmatpush1.bf16.msra.mxu0 0
    %479 = vmatprep.subr.bf16.mxu0 0
    %480 = vmatpush1.bf16.msra.mxu0 0
    %481 = vmatprep.subr.bf16.mxu0 0
    %482 = vmatpush1.bf16.msra.mxu0 0
    %483 = vmatprep.subr.bf16.mxu0 0
    %484 = vmatpush1.bf16.msra.mxu0 0
    %485 = vmatprep.subr.bf16.mxu0 0
    %486 = vmatpush1.bf16.msra.mxu0 0
    %487 = vmatprep.subr.bf16.mxu0 0
    %488 = vmatpush1.bf16.msra.mxu0 0
    %489 = vmatprep.subr.bf16.mxu0 0
    %490 = vmatpush1.bf16.msra.mxu0 0
    %491 = vmatprep.subr.bf16.mxu0 0
    %492 = vmatpush1.bf16.msra.mxu0 0
    %493 = vmatprep.subr.bf16.mxu0 0
    %494 = vmatpush1.bf16.msra.mxu0 0
    %495 = vmatprep.subr.bf16.mxu0 0
    %496 = vmatpush1.bf16.msra.mxu0 0
    %497 = vmatprep.subr.bf16.mxu0 0
    %498 = vmatpush1.bf16.msra.mxu0 0
    %499 = vmatprep.mubr.bf16.mxu0 0
    %500 = vmatmul.mubr.bf16.gmra.mrb[0].mxu0 %v465
    %v501 = vpop.f32.mrb[0].mxu0
    %v502 = vadd.f32 0.0, %v501
    %v503 = vpop.f32.mrb[0].mxu0
    %v504 = vadd.f32 0.0, %v503
    %v505 = vpop.f32.mrb[0].mxu0
    %v506 = vpop.f32.mrb[0].mxu0
    %507 = vdwg.mxu0
    %v510 = vrot.slane %v502, 2
    %v511 = vrot.slane %v504, 2
    %v514 = vadd.f32 %v294, %v510
    %v515 = vadd.f32 %v295, %v511
    %v516 = vxor.u32 %v514, 2147483648
    %v517 = vxor.u32 %v515, 2147483648
    %v518 = vmul.f32 %v516, 1.442695
    %v519 = vpow.pop %v518
    %v520 = vmul.f32 %v517, 1.442695
    %v521 = vpow.pop %v520
    %v522 = vadd.f32 %v519, 1.0
    %v523 = vadd.f32 %v521, 1.0
    %v524 = vrcp.pop %v522
    %v525 = vmul.f32 1.0, %v524
    %v526 = vrcp.pop %v523
    %v527 = vmul.f32 1.0, %v526
    %v528 = vtanh.pop %v515
    %v530 = vrot.slane %v456, 6
    %v532 = vmul.f32 %v525, %v530
    %v533 = vmul.f32 %v525, %v528
    %535 = vrot.lane.b32.xlu0 %v533, 64
    %v536 = vpop.permute.xlu0 %535
    %v538 = vadd.f32 %v532, %v536
    %v539 = vtanh.pop %v538
    %v540 = vmul.f32 %v527, %v539
    %v543 = vrot.slane %v165, 6
    %v544 = vrot.slane %v167, 6
    %v547 = vsel %vm77, %v169, %v543
    %v548 = vsel %vm78, %v171, %v544
    %v549 = vpack.c.bf16 %v540, %v540
    %v551 = vrot.slane %v549, 3
    %552 = vrot.lane.b32.xlu0 %v551, 64
    %v553 = vpop.permute.xlu0 %552
    %v555 = vsel %vm221, %v553, 0
    %557 = vmatprep.subr.bf16.mxu0 %v206
    %558 = vmatpush1.bf16.msra.mxu0 %v205
    %559 = vmatprep.subr.bf16.mxu0 %v208
    %560 = vmatpush1.bf16.msra.mxu0 %v207
    %561 = vmatprep.subr.bf16.mxu0 %v210
    %562 = vmatpush1.bf16.msra.mxu0 %v209
    %563 = vmatprep.subr.bf16.mxu0 %v212
    %564 = vmatpush1.bf16.msra.mxu0 %v211
    %565 = vmatprep.subr.bf16.mxu0 0
    %566 = vmatpush1.bf16.msra.mxu0 0
    %567 = vmatprep.subr.bf16.mxu0 0
    %568 = vmatpush1.bf16.msra.mxu0 0
    %569 = vmatprep.subr.bf16.mxu0 0
    %570 = vmatpush1.bf16.msra.mxu0 0
    %571 = vmatprep.subr.bf16.mxu0 0
    %572 = vmatpush1.bf16.msra.mxu0 0
    %573 = vmatprep.subr.bf16.mxu0 0
    %574 = vmatpush1.bf16.msra.mxu0 0
    %575 = vmatprep.subr.bf16.mxu0 0
    %576 = vmatpush1.bf16.msra.mxu0 0
    %577 = vmatprep.subr.bf16.mxu0 0
    %578 = vmatpush1.bf16.msra.mxu0 0
    %579 = vmatprep.subr.bf16.mxu0 0
    %580 = vmatpush1.bf16.msra.mxu0 0
    %581 = vmatprep.subr.bf16.mxu0 0
    %582 = vmatpush1.bf16.msra.mxu0 0
    %583 = vmatprep.subr.bf16.mxu0 0
    %584 = vmatpush1.bf16.msra.mxu0 0
    %585 = vmatprep.subr.bf16.mxu0 0
    %586 = vmatpush1.bf16.msra.mxu0 0
    %587 = vmatprep.subr.bf16.mxu0 0
    %588 = vmatpush1.bf16.msra.mxu0 0
    %589 = vmatprep.mubr.bf16.mxu0 0
    %590 = vmatmul.mubr.bf16.gmra.mrb[0].mxu0 %v555
    %v591 = vpop.f32.mrb[0].mxu0
    %v592 = vadd.f32 0.0, %v591
    %v593 = vpop.f32.mrb[0].mxu0
    %v594 = vadd.f32 0.0, %v593
    %v595 = vpop.f32.mrb[0].mxu0
    %v596 = vpop.f32.mrb[0].mxu0
    %597 = vdwg.mxu0
    %v598 = vadd.f32 %v547, %v592
    %v599 = vadd.f32 %v548, %v594
    %v600 = vxor.u32 %v598, 2147483648
    %v601 = vxor.u32 %v599, 2147483648
    %v602 = vmul.f32 %v600, 1.442695
    %v603 = vpow.pop %v602
    %v604 = vmul.f32 %v601, 1.442695
    %v605 = vpow.pop %v604
    %v606 = vadd.f32 %v603, 1.0
    %v607 = vadd.f32 %v605, 1.0
    %v608 = vrcp.pop %v606
    %v609 = vmul.f32 1.0, %v608
    %v610 = vrcp.pop %v607
    %v611 = vmul.f32 1.0, %v610
    %v612 = vtanh.pop %v599
    %v614 = vrot.slane %v538, 6
    %v616 = vmul.f32 %v609, %v614
    %v617 = vmul.f32 %v609, %v612
    %619 = vrot.lane.b32.xlu0 %v617, 64
    %v620 = vpop.permute.xlu0 %619
    %v622 = vadd.f32 %v616, %v620
    %v623 = vtanh.pop %v622
    %v624 = vmul.f32 %v611, %v623
    %v625 = vrot.slane %v165, 2
    %v626 = vrot.slane %v167, 2
    %v629 = vsel %vm77, %v169, %v625
    %v630 = vsel %vm78, %v171, %v626
    %v631 = vpack.c.bf16 %v624, %v624
    %633 = vrot.lane.b32.xlu0 %v631, 64
    %v634 = vpop.permute.xlu0 %633
    %v636 = vsel %vm221, %v634, 0
    %638 = vmatprep.subr.bf16.mxu0 %v206
    %639 = vmatpush1.bf16.msra.mxu0 %v205
    %640 = vmatprep.subr.bf16.mxu0 %v208
    %641 = vmatpush1.bf16.msra.mxu0 %v207
    %642 = vmatprep.subr.bf16.mxu0 %v210
    %643 = vmatpush1.bf16.msra.mxu0 %v209
    %644 = vmatprep.subr.bf16.mxu0 %v212
    %645 = vmatpush1.bf16.msra.mxu0 %v211
    %646 = vmatprep.subr.bf16.mxu0 0
    %647 = vmatpush1.bf16.msra.mxu0 0
    %648 = vmatprep.subr.bf16.mxu0 0
    %649 = vmatpush1.bf16.msra.mxu0 0
    %650 = vmatprep.subr.bf16.mxu0 0
    %651 = vmatpush1.bf16.msra.mxu0 0
    %652 = vmatprep.subr.bf16.mxu0 0
    %653 = vmatpush1.bf16.msra.mxu0 0
    %654 = vmatprep.subr.bf16.mxu0 0
    %655 = vmatpush1.bf16.msra.mxu0 0
    %656 = vmatprep.subr.bf16.mxu0 0
    %657 = vmatpush1.bf16.msra.mxu0 0
    %658 = vmatprep.subr.bf16.mxu0 0
    %659 = vmatpush1.bf16.msra.mxu0 0
    %660 = vmatprep.subr.bf16.mxu0 0
    %661 = vmatpush1.bf16.msra.mxu0 0
    %662 = vmatprep.subr.bf16.mxu0 0
    %663 = vmatpush1.bf16.msra.mxu0 0
    %664 = vmatprep.subr.bf16.mxu0 0
    %665 = vmatpush1.bf16.msra.mxu0 0
    %666 = vmatprep.subr.bf16.mxu0 0
    %667 = vmatpush1.bf16.msra.mxu0 0
    %668 = vmatprep.subr.bf16.mxu0 0
    %669 = vmatpush1.bf16.msra.mxu0 0
    %670 = vmatprep.mubr.bf16.mxu0 0
    %671 = vmatmul.mubr.bf16.gmra.mrb[0].mxu0 %v636
    %v672 = vpop.f32.mrb[0].mxu0
    %v673 = vadd.f32 0.0, %v672
    %v674 = vpop.f32.mrb[0].mxu0
    %v675 = vadd.f32 0.0, %v674
    %v676 = vpop.f32.mrb[0].mxu0
    %v677 = vpop.f32.mrb[0].mxu0
    %678 = vdwg.mxu0
    %v681 = vrot.slane %v673, 6
    %v682 = vrot.slane %v675, 6
    %v685 = vadd.f32 %v629, %v681
    %v686 = vadd.f32 %v630, %v682
    %v687 = vxor.u32 %v685, 2147483648
    %v688 = vxor.u32 %v686, 2147483648
    %v689 = vmul.f32 %v687, 1.442695
    %v690 = vpow.pop %v689
    %v691 = vmul.f32 %v688, 1.442695
    %v692 = vpow.pop %v691
    %v693 = vadd.f32 %v690, 1.0
    %v694 = vadd.f32 %v692, 1.0
    %v695 = vrcp.pop %v693
    %v696 = vmul.f32 1.0, %v695
    %v697 = vrcp.pop %v694
    %v698 = vmul.f32 1.0, %v697
    %v699 = vtanh.pop %v686
    %v701 = vrot.slane %v622, 6
    %v703 = vmul.f32 %v696, %v701
    %v704 = vmul.f32 %v696, %v699
    %706 = vrot.lane.b32.xlu0 %v704, 64
    %v707 = vpop.permute.xlu0 %706
    %v709 = vadd.f32 %v703, %v707
    %v710 = vtanh.pop %v709
    %v711 = vmul.f32 %v698, %v710
    %v712 = vpack.c.bf16 %v711, %v711
    %v714 = vrot.slane %v712, 1
    %715 = vrot.lane.b32.xlu0 %v714, 64
    %v716 = vpop.permute.xlu0 %715
    %v718 = vsel %vm221, %v716, 0
    %720 = vmatprep.subr.bf16.mxu0 %v206
    %721 = vmatpush1.bf16.msra.mxu0 %v205
    %722 = vmatprep.subr.bf16.mxu0 %v208
    %723 = vmatpush1.bf16.msra.mxu0 %v207
    %724 = vmatprep.subr.bf16.mxu0 %v210
    %725 = vmatpush1.bf16.msra.mxu0 %v209
    %726 = vmatprep.subr.bf16.mxu0 %v212
    %727 = vmatpush1.bf16.msra.mxu0 %v211
    %728 = vmatprep.subr.bf16.mxu0 0
    %729 = vmatpush1.bf16.msra.mxu0 0
    %730 = vmatprep.subr.bf16.mxu0 0
    %731 = vmatpush1.bf16.msra.mxu0 0
    %732 = vmatprep.subr.bf16.mxu0 0
    %733 = vmatpush1.bf16.msra.mxu0 0
    %734 = vmatprep.subr.bf16.mxu0 0
    %735 = vmatpush1.bf16.msra.mxu0 0
    %736 = vmatprep.subr.bf16.mxu0 0
    %737 = vmatpush1.bf16.msra.mxu0 0
    %738 = vmatprep.subr.bf16.mxu0 0
    %739 = vmatpush1.bf16.msra.mxu0 0
    %740 = vmatprep.subr.bf16.mxu0 0
    %741 = vmatpush1.bf16.msra.mxu0 0
    %742 = vmatprep.subr.bf16.mxu0 0
    %743 = vmatpush1.bf16.msra.mxu0 0
    %744 = vmatprep.subr.bf16.mxu0 0
    %745 = vmatpush1.bf16.msra.mxu0 0
    %746 = vmatprep.subr.bf16.mxu0 0
    %747 = vmatpush1.bf16.msra.mxu0 0
    %748 = vmatprep.subr.bf16.mxu0 0
    %749 = vmatpush1.bf16.msra.mxu0 0
    %750 = vmatprep.subr.bf16.mxu0 0
    %751 = vmatpush1.bf16.msra.mxu0 0
    %752 = vmatprep.mubr.bf16.mxu0 0
    %753 = vmatmul.mubr.bf16.gmra.mrb[0].mxu0 %v718
    %v754 = vpop.f32.mrb[0].mxu0
    %v755 = vadd.f32 0.0, %v754
    %v756 = vpop.f32.mrb[0].mxu0
    %v757 = vadd.f32 0.0, %v756
    %v758 = vpop.f32.mrb[0].mxu0
    %v759 = vpop.f32.mrb[0].mxu0
    %760 = vdwg.mxu0
    %v763 = vrot.slane %v755, 4
    %v764 = vrot.slane %v757, 4
    %v767 = vadd.f32 %v547, %v763
    %v768 = vadd.f32 %v548, %v764
    %v769 = vxor.u32 %v767, 2147483648
    %v770 = vxor.u32 %v768, 2147483648
    %v771 = vmul.f32 %v769, 1.442695
    %v772 = vpow.pop %v771
    %v773 = vmul.f32 %v770, 1.442695
    %v774 = vpow.pop %v773
    %v775 = vadd.f32 %v772, 1.0
    %v776 = vadd.f32 %v774, 1.0
    %v777 = vrcp.pop %v775
    %v778 = vmul.f32 1.0, %v777
    %v779 = vrcp.pop %v776
    %v780 = vmul.f32 1.0, %v779
    %v781 = vtanh.pop %v768
    %v783 = vrot.slane %v709, 6
    %v785 = vmul.f32 %v778, %v783
    %v786 = vmul.f32 %v778, %v781
    %788 = vrot.lane.b32.xlu0 %v786, 64
    %v789 = vpop.permute.xlu0 %788
    %v791 = vadd.f32 %v785, %v789
    %v792 = vtanh.pop %v791
    %v793 = vmul.f32 %v780, %v792
    %v794 = vpack.c.bf16 %v793, %v793
    %v796 = vrot.slane %v794, 2
    %797 = vrot.lane.b32.xlu0 %v796, 64
    %v798 = vpop.permute.xlu0 %797
    %v800 = vsel %vm221, %v798, 0
    %802 = vmatprep.subr.bf16.mxu0 %v206
    %803 = vmatpush1.bf16.msra.mxu0 %v205
    %804 = vmatprep.subr.bf16.mxu0 %v208
    %805 = vmatpush1.bf16.msra.mxu0 %v207
    %806 = vmatprep.subr.bf16.mxu0 %v210
    %807 = vmatpush1.bf16.msra.mxu0 %v209
    %808 = vmatprep.subr.bf16.mxu0 %v212
    %809 = vmatpush1.bf16.msra.mxu0 %v211
    %810 = vmatprep.subr.bf16.mxu0 0
    %811 = vmatpush1.bf16.msra.mxu0 0
    %812 = vmatprep.subr.bf16.mxu0 0
    %813 = vmatpush1.bf16.msra.mxu0 0
    %814 = vmatprep.subr.bf16.mxu0 0
    %815 = vmatpush1.bf16.msra.mxu0 0
    %816 = vmatprep.subr.bf16.mxu0 0
    %817 = vmatpush1.bf16.msra.mxu0 0
    %818 = vmatprep.subr.bf16.mxu0 0
    %819 = vmatpush1.bf16.msra.mxu0 0
    %820 = vmatprep.subr.bf16.mxu0 0
    %821 = vmatpush1.bf16.msra.mxu0 0
    %822 = vmatprep.subr.bf16.mxu0 0
    %823 = vmatpush1.bf16.msra.mxu0 0
    %824 = vmatprep.subr.bf16.mxu0 0
    %825 = vmatpush1.bf16.msra.mxu0 0
    %826 = vmatprep.subr.bf16.mxu0 0
    %827 = vmatpush1.bf16.msra.mxu0 0
    %828 = vmatprep.subr.bf16.mxu0 0
    %829 = vmatpush1.bf16.msra.mxu0 0
    %830 = vmatprep.subr.bf16.mxu0 0
    %831 = vmatpush1.bf16.msra.mxu0 0
    %832 = vmatprep.subr.bf16.mxu0 0
    %833 = vmatpush1.bf16.msra.mxu0 0
    %834 = vmatprep.mubr.bf16.mxu0 0
    %835 = vmatmul.mubr.bf16.gmra.mrb[0].mxu0 %v800
    %v836 = vpop.f32.mrb[0].mxu0
    %v837 = vadd.f32 0.0, %v836
    %v838 = vpop.f32.mrb[0].mxu0
    %v839 = vadd.f32 0.0, %v838
    %v840 = vpop.f32.mrb[0].mxu0
    %v841 = vpop.f32.mrb[0].mxu0
    %842 = vdwg.mxu0
    %v845 = vrot.slane %v837, 2
    %v846 = vrot.slane %v839, 2
    %v849 = vadd.f32 %v629, %v845
    %v850 = vadd.f32 %v630, %v846
    %v851 = vxor.u32 %v849, 2147483648
    %v852 = vxor.u32 %v850, 2147483648
    %v853 = vmul.f32 %v851, 1.442695
    %v854 = vpow.pop %v853
    %v855 = vmul.f32 %v852, 1.442695
    %v856 = vpow.pop %v855
    %v857 = vadd.f32 %v854, 1.0
    %v858 = vadd.f32 %v856, 1.0
    %v859 = vrcp.pop %v857
    %v860 = vmul.f32 1.0, %v859
    %v861 = vrcp.pop %v858
    %v862 = vmul.f32 1.0, %v861
    %v863 = vtanh.pop %v850
    %v865 = vrot.slane %v791, 6
    %v867 = vmul.f32 %v860, %v865
    %v868 = vmul.f32 %v860, %v863
    %870 = vrot.lane.b32.xlu0 %v868, 64
    %v871 = vpop.permute.xlu0 %870
    %v873 = vadd.f32 %v867, %v871
    %v874 = vtanh.pop %v873
    %v875 = vmul.f32 %v862, %v874
    %877 = vrot.lane.b32.xlu0 %v289, 64
    %v878 = vpop.permute.xlu0 %877
    %v881 = vrot.slane %v875, 6
    %882 = vrot.lane.b32.xlu0 %v881, 64
    %v883 = vpop.permute.xlu0 %882
    %v885 = vsel %vm126, %v878, %v883
    %887 = vrot.lane.b32.xlu0 %v376, 64
    %v888 = vpop.permute.xlu0 %887
    %v891 = vrot.slane %v793, 2
    %892 = vrot.lane.b32.xlu0 %v891, 64
    %v893 = vpop.permute.xlu0 %892
    %v895 = vsel %vm126, %v888, %v893
    %897 = vrot.lane.b32.xlu0 %v458, 64
    %v898 = vpop.permute.xlu0 %897
    %v901 = vrot.slane %v711, 6
    %902 = vrot.lane.b32.xlu0 %v901, 64
    %v903 = vpop.permute.xlu0 %902
    %v905 = vsel %vm126, %v898, %v903
    %907 = vrot.lane.b32.xlu0 %v540, 64
    %v908 = vpop.permute.xlu0 %907
    %v911 = vrot.slane %v624, 2
    %912 = vrot.lane.b32.xlu0 %v911, 64
    %v913 = vpop.permute.xlu0 %912
    %v915 = vsel %vm126, %v908, %v913
    %916 = vrot.lane.b32.xlu0 %v624, 64
    %v917 = vpop.permute.xlu0 %916
    %v919 = vrot.slane %v540, 6
    %920 = vrot.lane.b32.xlu0 %v919, 64
    %v921 = vpop.permute.xlu0 %920
    %v923 = vsel %vm126, %v917, %v921
    %924 = vrot.lane.b32.xlu0 %v711, 64
    %v925 = vpop.permute.xlu0 %924
    %v927 = vrot.slane %v458, 2
    %928 = vrot.lane.b32.xlu0 %v927, 64
    %v929 = vpop.permute.xlu0 %928
    %v931 = vsel %vm126, %v925, %v929
    %932 = vrot.lane.b32.xlu0 %v793, 64
    %v933 = vpop.permute.xlu0 %932
    %v935 = vrot.slane %v376, 6
    %936 = vrot.lane.b32.xlu0 %v935, 64
    %v937 = vpop.permute.xlu0 %936
    %v939 = vsel %vm126, %v933, %v937
    %940 = vrot.lane.b32.xlu0 %v875, 64
    %v941 = vpop.permute.xlu0 %940
    %v943 = vrot.slane %v289, 2
    %944 = vrot.lane.b32.xlu0 %v943, 64
    %v945 = vpop.permute.xlu0 %944
    %v947 = vsel %vm126, %v941, %v945
    %vm948 = vcmask 1041408
    %v949 = vsel %vm948, %v885, %v895
    %vm950 = vcmask 1043456
    %v951 = vsel %vm950, %v949, %v905
    %vm952 = vcmask 1045504
    %v953 = vsel %vm952, %v951, %v915
    %v954 = vsel %vm948, %v923, %v931
    %v955 = vsel %vm950, %v954, %v939
    %v956 = vsel %vm952, %v955, %v947
    %v957 = vld [vmem:[%s5] sm:$0xff]
    %v958 = vld [vmem:[%s5 + $0x8] sm:$0xff]
    %v959 = vld [vmem:[%s5 + $0x10] sm:$0xff]
    %v960 = vld [vmem:[%s5 + $0x18] sm:$0xff]
    %v961 = vld [vmem:[%s5 + $0x20] sm:$0xff]
    %v962 = vld [vmem:[%s5 + $0x28] sm:$0xff]
    %v963 = vld [vmem:[%s5 + $0x30] sm:$0xff]
    %v964 = vld [vmem:[%s5 + $0x38] sm:$0xff]
    %v965 = vpack.c.bf16 %v956, %v953
    %v966 = vld [vmem:[%s4] sm:$0xff]
    %v967 = vld [vmem:[%s4 + $0x8] sm:$0xff]
    %v968 = vld [vmem:[%s4 + $0x10] sm:$0xff]
    %v969 = vld [vmem:[%s4 + $0x18] sm:$0xff]
    %v970 = vld [vmem:[%s4 + $0x20] sm:$0xff]
    %v971 = vld [vmem:[%s4 + $0x28] sm:$0xff]
    %v972 = vld [vmem:[%s4 + $0x30] sm:$0xff]
    %v973 = vld [vmem:[%s4 + $0x38] sm:$0xff]
    %v974 = vld [vmem:[%s6] sm:$0x3]
    %v976 = vlaneseq
    %v977 = vshrl.u32 %v976, 7
    %v978 = vsub.s32 0, %v977
    %v979 = vrot.slane %v974, %v978
    %v980 = vlaneseq
    %v981 = vshrl.u32 %v980, 7
    %v982 = vsub.s32 1, %v981
    %v983 = vrot.slane %v974, %v982
    %v994 = vunpack.c.l.b16 %v966
    %v995 = vunpack.c.h.b16 %v966
    %v996 = vunpack.c.l.b16 %v967
    %v997 = vunpack.c.h.b16 %v967
    %v998 = vunpack.c.l.b16 %v968
    %v999 = vunpack.c.h.b16 %v968
    %v1000 = vunpack.c.l.b16 %v969
    %v1001 = vunpack.c.h.b16 %v969
    %v1002 = vunpack.c.l.b16 %v970
    %v1003 = vunpack.c.h.b16 %v970
    %v1004 = vunpack.c.l.b16 %v971
    %v1005 = vunpack.c.h.b16 %v971
    %v1006 = vunpack.c.l.b16 %v972
    %v1007 = vunpack.c.h.b16 %v972
    %v1008 = vunpack.c.l.b16 %v973
    %v1009 = vunpack.c.h.b16 %v973
    %v1010 = vpack.c.b16 %v996, %v994
    %v1011 = vpack.c.b16 %v997, %v995
    %v1012 = vpack.c.b16 %v1000, %v998
    %v1013 = vpack.c.b16 %v1001, %v999
    %v1014 = vpack.c.b16 %v1004, %v1002
    %v1015 = vpack.c.b16 %v1005, %v1003
    %v1016 = vpack.c.b16 %v1008, %v1006
    %v1017 = vpack.c.b16 %v1009, %v1007
    %v1027 = vsel %vm221, %v965, 0
    %1029 = vmatprep.subr.bf16.mxu0 %v1011
    %1030 = vmatpush1.bf16.msra.mxu0 %v1010
    %1031 = vmatprep.subr.bf16.mxu0 %v1013
    %1032 = vmatpush1.bf16.msra.mxu0 %v1012
    %1033 = vmatprep.subr.bf16.mxu0 %v1015
    %1034 = vmatpush1.bf16.msra.mxu0 %v1014
    %1035 = vmatprep.subr.bf16.mxu0 %v1017
    %1036 = vmatpush1.bf16.msra.mxu0 %v1016
    %1037 = vmatprep.subr.bf16.mxu0 0
    %1038 = vmatpush1.bf16.msra.mxu0 0
    %1039 = vmatprep.subr.bf16.mxu0 0
    %1040 = vmatpush1.bf16.msra.mxu0 0
    %1041 = vmatprep.subr.bf16.mxu0 0
    %1042 = vmatpush1.bf16.msra.mxu0 0
    %1043 = vmatprep.subr.bf16.mxu0 0
    %1044 = vmatpush1.bf16.msra.mxu0 0
    %1045 = vmatprep.subr.bf16.mxu0 0
    %1046 = vmatpush1.bf16.msra.mxu0 0
    %1047 = vmatprep.subr.bf16.mxu0 0
    %1048 = vmatpush1.bf16.msra.mxu0 0
    %1049 = vmatprep.subr.bf16.mxu0 0
    %1050 = vmatpush1.bf16.msra.mxu0 0
    %1051 = vmatprep.subr.bf16.mxu0 0
    %1052 = vmatpush1.bf16.msra.mxu0 0
    %1053 = vmatprep.subr.bf16.mxu0 0
    %1054 = vmatpush1.bf16.msra.mxu0 0
    %1055 = vmatprep.subr.bf16.mxu0 0
    %1056 = vmatpush1.bf16.msra.mxu0 0
    %1057 = vmatprep.subr.bf16.mxu0 0
    %1058 = vmatpush1.bf16.msra.mxu0 0
    %1059 = vmatprep.subr.bf16.mxu0 0
    %1060 = vmatpush1.bf16.msra.mxu0 0
    %1061 = vmatprep.mubr.bf16.mxu0 0
    %1062 = vmatmul.mubr.bf16.gmra.mrb[0].mxu0 %v1027
    %v1063 = vpop.f32.mrb[0].mxu0
    %v1064 = vadd.f32 %v979, %v1063
    %v1065 = vpop.f32.mrb[0].mxu0
    %v1066 = vadd.f32 %v983, %v1065
    %v1067 = vpop.f32.mrb[0].mxu0
    %v1068 = vadd.f32 %v979, %v1067
    %v1069 = vpop.f32.mrb[0].mxu0
    %v1070 = vadd.f32 %v983, %v1069
    %1071 = vdwg.mxu0
    %v1074 = vrot.slane %v1068, 6
    %v1075 = vrot.slane %v1070, 6
    %v1078 = vsel %vm77, %v1064, %v1074
    %v1079 = vsel %vm78, %v1066, %v1075
    %v1088 = vunpack.c.l.b16 %v957
    %v1089 = vunpack.c.h.b16 %v957
    %v1090 = vunpack.c.l.b16 %v958
    %v1091 = vunpack.c.h.b16 %v958
    %v1092 = vunpack.c.l.b16 %v959
    %v1093 = vunpack.c.h.b16 %v959
    %v1094 = vunpack.c.l.b16 %v960
    %v1095 = vunpack.c.h.b16 %v960
    %v1096 = vunpack.c.l.b16 %v961
    %v1097 = vunpack.c.h.b16 %v961
    %v1098 = vunpack.c.l.b16 %v962
    %v1099 = vunpack.c.h.b16 %v962
    %v1100 = vunpack.c.l.b16 %v963
    %v1101 = vunpack.c.h.b16 %v963
    %v1102 = vunpack.c.l.b16 %v964
    %v1103 = vunpack.c.h.b16 %v964
    %v1104 = vpack.c.b16 %v1090, %v1088
    %v1105 = vpack.c.b16 %v1091, %v1089
    %v1106 = vpack.c.b16 %v1094, %v1092
    %v1107 = vpack.c.b16 %v1095, %v1093
    %v1108 = vpack.c.b16 %v1098, %v1096
    %v1109 = vpack.c.b16 %v1099, %v1097
    %v1110 = vpack.c.b16 %v1102, %v1100
    %v1111 = vpack.c.b16 %v1103, %v1101
    %1120 = vmatprep.subr.bf16.mxu0 %v1105
    %1121 = vmatpush1.bf16.msra.mxu0 %v1104
    %1122 = vmatprep.subr.bf16.mxu0 %v1107
    %1123 = vmatpush1.bf16.msra.mxu0 %v1106
    %1124 = vmatprep.subr.bf16.mxu0 %v1109
    %1125 = vmatpush1.bf16.msra.mxu0 %v1108
    %1126 = vmatprep.subr.bf16.mxu0 %v1111
    %1127 = vmatpush1.bf16.msra.mxu0 %v1110
    %1128 = vmatprep.subr.bf16.mxu0 0
    %1129 = vmatpush1.bf16.msra.mxu0 0
    %1130 = vmatprep.subr.bf16.mxu0 0
    %1131 = vmatpush1.bf16.msra.mxu0 0
    %1132 = vmatprep.subr.bf16.mxu0 0
    %1133 = vmatpush1.bf16.msra.mxu0 0
    %1134 = vmatprep.subr.bf16.mxu0 0
    %1135 = vmatpush1.bf16.msra.mxu0 0
    %1136 = vmatprep.subr.bf16.mxu0 0
    %1137 = vmatpush1.bf16.msra.mxu0 0
    %1138 = vmatprep.subr.bf16.mxu0 0
    %1139 = vmatpush1.bf16.msra.mxu0 0
    %1140 = vmatprep.subr.bf16.mxu0 0
    %1141 = vmatpush1.bf16.msra.mxu0 0
    %1142 = vmatprep.subr.bf16.mxu0 0
    %1143 = vmatpush1.bf16.msra.mxu0 0
    %1144 = vmatprep.subr.bf16.mxu0 0
    %1145 = vmatpush1.bf16.msra.mxu0 0
    %1146 = vmatprep.subr.bf16.mxu0 0
    %1147 = vmatpush1.bf16.msra.mxu0 0
    %1148 = vmatprep.subr.bf16.mxu0 0
    %1149 = vmatpush1.bf16.msra.mxu0 0
    %1150 = vmatprep.subr.bf16.mxu0 0
    %1151 = vmatpush1.bf16.msra.mxu0 0
    %1152 = vmatprep.mubr.bf16.mxu0 0
    %1153 = vmatmul.mubr.bf16.gmra.mrb[0].mxu0 %v223
    %v1154 = vpop.f32.mrb[0].mxu0
    %v1155 = vadd.f32 0.0, %v1154
    %v1156 = vpop.f32.mrb[0].mxu0
    %v1157 = vadd.f32 0.0, %v1156
    %v1158 = vpop.f32.mrb[0].mxu0
    %v1159 = vpop.f32.mrb[0].mxu0
    %1160 = vdwg.mxu0
    %v1161 = vadd.f32 %v1078, %v1155
    %v1162 = vadd.f32 %v1079, %v1157
    %v1163 = vxor.u32 %v1161, 2147483648
    %v1164 = vxor.u32 %v1162, 2147483648
    %v1165 = vmul.f32 %v1163, 1.442695
    %v1166 = vpow.pop %v1165
    %v1167 = vmul.f32 %v1164, 1.442695
    %v1168 = vpow.pop %v1167
    %v1169 = vadd.f32 %v1166, 1.0
    %v1170 = vadd.f32 %v1168, 1.0
    %v1171 = vrcp.pop %v1169
    %v1172 = vmul.f32 1.0, %v1171
    %v1173 = vrcp.pop %v1170
    %v1174 = vmul.f32 1.0, %v1173
    %v1175 = vtanh.pop %v1162
    %v1176 = vmul.f32 %v1172, 0.0
    %v1177 = vmul.f32 %v1172, %v1175
    %1179 = vrot.lane.b32.xlu0 %v1177, 64
    %v1180 = vpop.permute.xlu0 %1179
    %v1182 = vadd.f32 %v1176, %v1180
    %v1183 = vtanh.pop %v1182
    %v1184 = vmul.f32 %v1174, %v1183
    %v1185 = vrot.slane %v1068, 2
    %v1186 = vrot.slane %v1070, 2
    %v1189 = vsel %vm77, %v1064, %v1185
    %v1190 = vsel %vm78, %v1066, %v1186
    %v1191 = vpack.c.bf16 %v1184, %v1184
    %1193 = vrot.lane.b32.xlu0 %v1191, 64
    %v1194 = vpop.permute.xlu0 %1193
    %v1196 = vsel %vm221, %v1194, 0
    %1198 = vmatprep.subr.bf16.mxu0 %v1105
    %1199 = vmatpush1.bf16.msra.mxu0 %v1104
    %1200 = vmatprep.subr.bf16.mxu0 %v1107
    %1201 = vmatpush1.bf16.msra.mxu0 %v1106
    %1202 = vmatprep.subr.bf16.mxu0 %v1109
    %1203 = vmatpush1.bf16.msra.mxu0 %v1108
    %1204 = vmatprep.subr.bf16.mxu0 %v1111
    %1205 = vmatpush1.bf16.msra.mxu0 %v1110
    %1206 = vmatprep.subr.bf16.mxu0 0
    %1207 = vmatpush1.bf16.msra.mxu0 0
    %1208 = vmatprep.subr.bf16.mxu0 0
    %1209 = vmatpush1.bf16.msra.mxu0 0
    %1210 = vmatprep.subr.bf16.mxu0 0
    %1211 = vmatpush1.bf16.msra.mxu0 0
    %1212 = vmatprep.subr.bf16.mxu0 0
    %1213 = vmatpush1.bf16.msra.mxu0 0
    %1214 = vmatprep.subr.bf16.mxu0 0
    %1215 = vmatpush1.bf16.msra.mxu0 0
    %1216 = vmatprep.subr.bf16.mxu0 0
    %1217 = vmatpush1.bf16.msra.mxu0 0
    %1218 = vmatprep.subr.bf16.mxu0 0
    %1219 = vmatpush1.bf16.msra.mxu0 0
    %1220 = vmatprep.subr.bf16.mxu0 0
    %1221 = vmatpush1.bf16.msra.mxu0 0
    %1222 = vmatprep.subr.bf16.mxu0 0
    %1223 = vmatpush1.bf16.msra.mxu0 0
    %1224 = vmatprep.subr.bf16.mxu0 0
    %1225 = vmatpush1.bf16.msra.mxu0 0
    %1226 = vmatprep.subr.bf16.mxu0 0
    %1227 = vmatpush1.bf16.msra.mxu0 0
    %1228 = vmatprep.subr.bf16.mxu0 0
    %1229 = vmatpush1.bf16.msra.mxu0 0
    %1230 = vmatprep.mubr.bf16.mxu0 0
    %1231 = vmatmul.mubr.bf16.gmra.mrb[0].mxu0 %v1196
    %v1232 = vpop.f32.mrb[0].mxu0
    %v1233 = vadd.f32 0.0, %v1232
    %v1234 = vpop.f32.mrb[0].mxu0
    %v1235 = vadd.f32 0.0, %v1234
    %v1236 = vpop.f32.mrb[0].mxu0
    %v1237 = vpop.f32.mrb[0].mxu0
    %1238 = vdwg.mxu0
    %v1241 = vrot.slane %v1233, 6
    %v1242 = vrot.slane %v1235, 6
    %v1245 = vadd.f32 %v1189, %v1241
    %v1246 = vadd.f32 %v1190, %v1242
    %v1247 = vxor.u32 %v1245, 2147483648
    %v1248 = vxor.u32 %v1246, 2147483648
    %v1249 = vmul.f32 %v1247, 1.442695
    %v1250 = vpow.pop %v1249
    %v1251 = vmul.f32 %v1248, 1.442695
    %v1252 = vpow.pop %v1251
    %v1253 = vadd.f32 %v1250, 1.0
    %v1254 = vadd.f32 %v1252, 1.0
    %v1255 = vrcp.pop %v1253
    %v1256 = vmul.f32 1.0, %v1255
    %v1257 = vrcp.pop %v1254
    %v1258 = vmul.f32 1.0, %v1257
    %v1259 = vtanh.pop %v1246
    %v1261 = vrot.slane %v1182, 6
    %v1263 = vmul.f32 %v1256, %v1261
    %v1264 = vmul.f32 %v1256, %v1259
    %1266 = vrot.lane.b32.xlu0 %v1264, 64
    %v1267 = vpop.permute.xlu0 %1266
    %v1269 = vadd.f32 %v1263, %v1267
    %v1270 = vtanh.pop %v1269
    %v1271 = vmul.f32 %v1258, %v1270
    %v1272 = vpack.c.bf16 %v1271, %v1271
    %v1274 = vrot.slane %v1272, 1
    %1275 = vrot.lane.b32.xlu0 %v1274, 64
    %v1276 = vpop.permute.xlu0 %1275
    %v1278 = vsel %vm221, %v1276, 0
    %1280 = vmatprep.subr.bf16.mxu0 %v1105
    %1281 = vmatpush1.bf16.msra.mxu0 %v1104
    %1282 = vmatprep.subr.bf16.mxu0 %v1107
    %1283 = vmatpush1.bf16.msra.mxu0 %v1106
    %1284 = vmatprep.subr.bf16.mxu0 %v1109
    %1285 = vmatpush1.bf16.msra.mxu0 %v1108
    %1286 = vmatprep.subr.bf16.mxu0 %v1111
    %1287 = vmatpush1.bf16.msra.mxu0 %v1110
    %1288 = vmatprep.subr.bf16.mxu0 0
    %1289 = vmatpush1.bf16.msra.mxu0 0
    %1290 = vmatprep.subr.bf16.mxu0 0
    %1291 = vmatpush1.bf16.msra.mxu0 0
    %1292 = vmatprep.subr.bf16.mxu0 0
    %1293 = vmatpush1.bf16.msra.mxu0 0
    %1294 = vmatprep.subr.bf16.mxu0 0
    %1295 = vmatpush1.bf16.msra.mxu0 0
    %1296 = vmatprep.subr.bf16.mxu0 0
    %1297 = vmatpush1.bf16.msra.mxu0 0
    %1298 = vmatprep.subr.bf16.mxu0 0
    %1299 = vmatpush1.bf16.msra.mxu0 0
    %1300 = vmatprep.subr.bf16.mxu0 0
    %1301 = vmatpush1.bf16.msra.mxu0 0
    %1302 = vmatprep.subr.bf16.mxu0 0
    %1303 = vmatpush1.bf16.msra.mxu0 0
    %1304 = vmatprep.subr.bf16.mxu0 0
    %1305 = vmatpush1.bf16.msra.mxu0 0
    %1306 = vmatprep.subr.bf16.mxu0 0
    %1307 = vmatpush1.bf16.msra.mxu0 0
    %1308 = vmatprep.subr.bf16.mxu0 0
    %1309 = vmatpush1.bf16.msra.mxu0 0
    %1310 = vmatprep.subr.bf16.mxu0 0
    %1311 = vmatpush1.bf16.msra.mxu0 0
    %1312 = vmatprep.mubr.bf16.mxu0 0
    %1313 = vmatmul.mubr.bf16.gmra.mrb[0].mxu0 %v1278
    %v1314 = vpop.f32.mrb[0].mxu0
    %v1315 = vadd.f32 0.0, %v1314
    %v1316 = vpop.f32.mrb[0].mxu0
    %v1317 = vadd.f32 0.0, %v1316
    %v1318 = vpop.f32.mrb[0].mxu0
    %v1319 = vpop.f32.mrb[0].mxu0
    %1320 = vdwg.mxu0
    %v1323 = vrot.slane %v1315, 4
    %v1324 = vrot.slane %v1317, 4
    %v1327 = vadd.f32 %v1078, %v1323
    %v1328 = vadd.f32 %v1079, %v1324
    %v1329 = vxor.u32 %v1327, 2147483648
    %v1330 = vxor.u32 %v1328, 2147483648
    %v1331 = vmul.f32 %v1329, 1.442695
    %v1332 = vpow.pop %v1331
    %v1333 = vmul.f32 %v1330, 1.442695
    %v1334 = vpow.pop %v1333
    %v1335 = vadd.f32 %v1332, 1.0
    %v1336 = vadd.f32 %v1334, 1.0
    %v1337 = vrcp.pop %v1335
    %v1338 = vmul.f32 1.0, %v1337
    %v1339 = vrcp.pop %v1336
    %v1340 = vmul.f32 1.0, %v1339
    %v1341 = vtanh.pop %v1328
    %v1343 = vrot.slane %v1269, 6
    %v1345 = vmul.f32 %v1338, %v1343
    %v1346 = vmul.f32 %v1338, %v1341
    %1348 = vrot.lane.b32.xlu0 %v1346, 64
    %v1349 = vpop.permute.xlu0 %1348
    %v1351 = vadd.f32 %v1345, %v1349
    %v1352 = vtanh.pop %v1351
    %v1353 = vmul.f32 %v1340, %v1352
    %v1354 = vpack.c.bf16 %v1353, %v1353
    %v1356 = vrot.slane %v1354, 2
    %1357 = vrot.lane.b32.xlu0 %v1356, 64
    %v1358 = vpop.permute.xlu0 %1357
    %v1360 = vsel %vm221, %v1358, 0
    %1362 = vmatprep.subr.bf16.mxu0 %v1105
    %1363 = vmatpush1.bf16.msra.mxu0 %v1104
    %1364 = vmatprep.subr.bf16.mxu0 %v1107
    %1365 = vmatpush1.bf16.msra.mxu0 %v1106
    %1366 = vmatprep.subr.bf16.mxu0 %v1109
    %1367 = vmatpush1.bf16.msra.mxu0 %v1108
    %1368 = vmatprep.subr.bf16.mxu0 %v1111
    %1369 = vmatpush1.bf16.msra.mxu0 %v1110
    %1370 = vmatprep.subr.bf16.mxu0 0
    %1371 = vmatpush1.bf16.msra.mxu0 0
    %1372 = vmatprep.subr.bf16.mxu0 0
    %1373 = vmatpush1.bf16.msra.mxu0 0
    %1374 = vmatprep.subr.bf16.mxu0 0
    %1375 = vmatpush1.bf16.msra.mxu0 0
    %1376 = vmatprep.subr.bf16.mxu0 0
    %1377 = vmatpush1.bf16.msra.mxu0 0
    %1378 = vmatprep.subr.bf16.mxu0 0
    %1379 = vmatpush1.bf16.msra.mxu0 0
    %1380 = vmatprep.subr.bf16.mxu0 0
    %1381 = vmatpush1.bf16.msra.mxu0 0
    %1382 = vmatprep.subr.bf16.mxu0 0
    %1383 = vmatpush1.bf16.msra.mxu0 0
    %1384 = vmatprep.subr.bf16.mxu0 0
    %1385 = vmatpush1.bf16.msra.mxu0 0
    %1386 = vmatprep.subr.bf16.mxu0 0
    %1387 = vmatpush1.bf16.msra.mxu0 0
    %1388 = vmatprep.subr.bf16.mxu0 0
    %1389 = vmatpush1.bf16.msra.mxu0 0
    %1390 = vmatprep.subr.bf16.mxu0 0
    %1391 = vmatpush1.bf16.msra.mxu0 0
    %1392 = vmatprep.subr.bf16.mxu0 0
    %1393 = vmatpush1.bf16.msra.mxu0 0
    %1394 = vmatprep.mubr.bf16.mxu0 0
    %1395 = vmatmul.mubr.bf16.gmra.mrb[0].mxu0 %v1360
    %v1396 = vpop.f32.mrb[0].mxu0
    %v1397 = vadd.f32 0.0, %v1396
    %v1398 = vpop.f32.mrb[0].mxu0
    %v1399 = vadd.f32 0.0, %v1398
    %v1400 = vpop.f32.mrb[0].mxu0
    %v1401 = vpop.f32.mrb[0].mxu0
    %1402 = vdwg.mxu0
    %v1405 = vrot.slane %v1397, 2
    %v1406 = vrot.slane %v1399, 2
    %v1409 = vadd.f32 %v1189, %v1405
    %v1410 = vadd.f32 %v1190, %v1406
    %v1411 = vxor.u32 %v1409, 2147483648
    %v1412 = vxor.u32 %v1410, 2147483648
    %v1413 = vmul.f32 %v1411, 1.442695
    %v1414 = vpow.pop %v1413
    %v1415 = vmul.f32 %v1412, 1.442695
    %v1416 = vpow.pop %v1415
    %v1417 = vadd.f32 %v1414, 1.0
    %v1418 = vadd.f32 %v1416, 1.0
    %v1419 = vrcp.pop %v1417
    %v1420 = vmul.f32 1.0, %v1419
    %v1421 = vrcp.pop %v1418
    %v1422 = vmul.f32 1.0, %v1421
    %v1423 = vtanh.pop %v1410
    %v1425 = vrot.slane %v1351, 6
    %v1427 = vmul.f32 %v1420, %v1425
    %v1428 = vmul.f32 %v1420, %v1423
    %1430 = vrot.lane.b32.xlu0 %v1428, 64
    %v1431 = vpop.permute.xlu0 %1430
    %v1433 = vadd.f32 %v1427, %v1431
    %v1434 = vtanh.pop %v1433
    %v1435 = vmul.f32 %v1422, %v1434
    %v1438 = vrot.slane %v1064, 6
    %v1439 = vrot.slane %v1066, 6
    %v1442 = vsel %vm77, %v1068, %v1438
    %v1443 = vsel %vm78, %v1070, %v1439
    %v1444 = vpack.c.bf16 %v1435, %v1435
    %v1446 = vrot.slane %v1444, 3
    %1447 = vrot.lane.b32.xlu0 %v1446, 64
    %v1448 = vpop.permute.xlu0 %1447
    %v1450 = vsel %vm221, %v1448, 0
    %1452 = vmatprep.subr.bf16.mxu0 %v1105
    %1453 = vmatpush1.bf16.msra.mxu0 %v1104
    %1454 = vmatprep.subr.bf16.mxu0 %v1107
    %1455 = vmatpush1.bf16.msra.mxu0 %v1106
    %1456 = vmatprep.subr.bf16.mxu0 %v1109
    %1457 = vmatpush1.bf16.msra.mxu0 %v1108
    %1458 = vmatprep.subr.bf16.mxu0 %v1111
    %1459 = vmatpush1.bf16.msra.mxu0 %v1110
    %1460 = vmatprep.subr.bf16.mxu0 0
    %1461 = vmatpush1.bf16.msra.mxu0 0
    %1462 = vmatprep.subr.bf16.mxu0 0
    %1463 = vmatpush1.bf16.msra.mxu0 0
    %1464 = vmatprep.subr.bf16.mxu0 0
    %1465 = vmatpush1.bf16.msra.mxu0 0
    %1466 = vmatprep.subr.bf16.mxu0 0
    %1467 = vmatpush1.bf16.msra.mxu0 0
    %1468 = vmatprep.subr.bf16.mxu0 0
    %1469 = vmatpush1.bf16.msra.mxu0 0
    %1470 = vmatprep.subr.bf16.mxu0 0
    %1471 = vmatpush1.bf16.msra.mxu0 0
    %1472 = vmatprep.subr.bf16.mxu0 0
    %1473 = vmatpush1.bf16.msra.mxu0 0
    %1474 = vmatprep.subr.bf16.mxu0 0
    %1475 = vmatpush1.bf16.msra.mxu0 0
    %1476 = vmatprep.subr.bf16.mxu0 0
    %1477 = vmatpush1.bf16.msra.mxu0 0
    %1478 = vmatprep.subr.bf16.mxu0 0
    %1479 = vmatpush1.bf16.msra.mxu0 0
    %1480 = vmatprep.subr.bf16.mxu0 0
    %1481 = vmatpush1.bf16.msra.mxu0 0
    %1482 = vmatprep.subr.bf16.mxu0 0
    %1483 = vmatpush1.bf16.msra.mxu0 0
    %1484 = vmatprep.mubr.bf16.mxu0 0
    %1485 = vmatmul.mubr.bf16.gmra.mrb[0].mxu0 %v1450
    %v1486 = vpop.f32.mrb[0].mxu0
    %v1487 = vadd.f32 0.0, %v1486
    %v1488 = vpop.f32.mrb[0].mxu0
    %v1489 = vadd.f32 0.0, %v1488
    %v1490 = vpop.f32.mrb[0].mxu0
    %v1491 = vpop.f32.mrb[0].mxu0
    %1492 = vdwg.mxu0
    %v1493 = vadd.f32 %v1442, %v1487
    %v1494 = vadd.f32 %v1443, %v1489
    %v1495 = vxor.u32 %v1493, 2147483648
    %v1496 = vxor.u32 %v1494, 2147483648
    %v1497 = vmul.f32 %v1495, 1.442695
    %v1498 = vpow.pop %v1497
    %v1499 = vmul.f32 %v1496, 1.442695
    %v1500 = vpow.pop %v1499
    %v1501 = vadd.f32 %v1498, 1.0
    %v1502 = vadd.f32 %v1500, 1.0
    %v1503 = vrcp.pop %v1501
    %v1504 = vmul.f32 1.0, %v1503
    %v1505 = vrcp.pop %v1502
    %v1506 = vmul.f32 1.0, %v1505
    %v1507 = vtanh.pop %v1494
    %v1509 = vrot.slane %v1433, 6
    %v1511 = vmul.f32 %v1504, %v1509
    %v1512 = vmul.f32 %v1504, %v1507
    %1514 = vrot.lane.b32.xlu0 %v1512, 64
    %v1515 = vpop.permute.xlu0 %1514
    %v1517 = vadd.f32 %v1511, %v1515
    %v1518 = vtanh.pop %v1517
    %v1519 = vmul.f32 %v1506, %v1518
    %v1520 = vrot.slane %v1064, 2
    %v1521 = vrot.slane %v1066, 2
    %v1524 = vsel %vm77, %v1068, %v1520
    %v1525 = vsel %vm78, %v1070, %v1521
    %v1526 = vpack.c.bf16 %v1519, %v1519
    %1528 = vrot.lane.b32.xlu0 %v1526, 64
    %v1529 = vpop.permute.xlu0 %1528
    %v1531 = vsel %vm221, %v1529, 0
    %1533 = vmatprep.subr.bf16.mxu0 %v1105
    %1534 = vmatpush1.bf16.msra.mxu0 %v1104
    %1535 = vmatprep.subr.bf16.mxu0 %v1107
    %1536 = vmatpush1.bf16.msra.mxu0 %v1106
    %1537 = vmatprep.subr.bf16.mxu0 %v1109
    %1538 = vmatpush1.bf16.msra.mxu0 %v1108
    %1539 = vmatprep.subr.bf16.mxu0 %v1111
    %1540 = vmatpush1.bf16.msra.mxu0 %v1110
    %1541 = vmatprep.subr.bf16.mxu0 0
    %1542 = vmatpush1.bf16.msra.mxu0 0
    %1543 = vmatprep.subr.bf16.mxu0 0
    %1544 = vmatpush1.bf16.msra.mxu0 0
    %1545 = vmatprep.subr.bf16.mxu0 0
    %1546 = vmatpush1.bf16.msra.mxu0 0
    %1547 = vmatprep.subr.bf16.mxu0 0
    %1548 = vmatpush1.bf16.msra.mxu0 0
    %1549 = vmatprep.subr.bf16.mxu0 0
    %1550 = vmatpush1.bf16.msra.mxu0 0
    %1551 = vmatprep.subr.bf16.mxu0 0
    %1552 = vmatpush1.bf16.msra.mxu0 0
    %1553 = vmatprep.subr.bf16.mxu0 0
    %1554 = vmatpush1.bf16.msra.mxu0 0
    %1555 = vmatprep.subr.bf16.mxu0 0
    %1556 = vmatpush1.bf16.msra.mxu0 0
    %1557 = vmatprep.subr.bf16.mxu0 0
    %1558 = vmatpush1.bf16.msra.mxu0 0
    %1559 = vmatprep.subr.bf16.mxu0 0
    %1560 = vmatpush1.bf16.msra.mxu0 0
    %1561 = vmatprep.subr.bf16.mxu0 0
    %1562 = vmatpush1.bf16.msra.mxu0 0
    %1563 = vmatprep.subr.bf16.mxu0 0
    %1564 = vmatpush1.bf16.msra.mxu0 0
    %1565 = vmatprep.mubr.bf16.mxu0 0
    %1566 = vmatmul.mubr.bf16.gmra.mrb[0].mxu0 %v1531
    %v1567 = vpop.f32.mrb[0].mxu0
    %v1568 = vadd.f32 0.0, %v1567
    %v1569 = vpop.f32.mrb[0].mxu0
    %v1570 = vadd.f32 0.0, %v1569
    %v1571 = vpop.f32.mrb[0].mxu0
    %v1572 = vpop.f32.mrb[0].mxu0
    %1573 = vdwg.mxu0
    %v1576 = vrot.slane %v1568, 6
    %v1577 = vrot.slane %v1570, 6
    %v1580 = vadd.f32 %v1524, %v1576
    %v1581 = vadd.f32 %v1525, %v1577
    %v1582 = vxor.u32 %v1580, 2147483648
    %v1583 = vxor.u32 %v1581, 2147483648
    %v1584 = vmul.f32 %v1582, 1.442695
    %v1585 = vpow.pop %v1584
    %v1586 = vmul.f32 %v1583, 1.442695
    %v1587 = vpow.pop %v1586
    %v1588 = vadd.f32 %v1585, 1.0
    %v1589 = vadd.f32 %v1587, 1.0
    %v1590 = vrcp.pop %v1588
    %v1591 = vmul.f32 1.0, %v1590
    %v1592 = vrcp.pop %v1589
    %v1593 = vmul.f32 1.0, %v1592
    %v1594 = vtanh.pop %v1581
    %v1596 = vrot.slane %v1517, 6
    %v1598 = vmul.f32 %v1591, %v1596
    %v1599 = vmul.f32 %v1591, %v1594
    %1601 = vrot.lane.b32.xlu0 %v1599, 64
    %v1602 = vpop.permute.xlu0 %1601
    %v1604 = vadd.f32 %v1598, %v1602
    %v1605 = vtanh.pop %v1604
    %v1606 = vmul.f32 %v1593, %v1605
    %v1607 = vpack.c.bf16 %v1606, %v1606
    %v1609 = vrot.slane %v1607, 1
    %1610 = vrot.lane.b32.xlu0 %v1609, 64
    %v1611 = vpop.permute.xlu0 %1610
    %v1613 = vsel %vm221, %v1611, 0
    %1615 = vmatprep.subr.bf16.mxu0 %v1105
    %1616 = vmatpush1.bf16.msra.mxu0 %v1104
    %1617 = vmatprep.subr.bf16.mxu0 %v1107
    %1618 = vmatpush1.bf16.msra.mxu0 %v1106
    %1619 = vmatprep.subr.bf16.mxu0 %v1109
    %1620 = vmatpush1.bf16.msra.mxu0 %v1108
    %1621 = vmatprep.subr.bf16.mxu0 %v1111
    %1622 = vmatpush1.bf16.msra.mxu0 %v1110
    %1623 = vmatprep.subr.bf16.mxu0 0
    %1624 = vmatpush1.bf16.msra.mxu0 0
    %1625 = vmatprep.subr.bf16.mxu0 0
    %1626 = vmatpush1.bf16.msra.mxu0 0
    %1627 = vmatprep.subr.bf16.mxu0 0
    %1628 = vmatpush1.bf16.msra.mxu0 0
    %1629 = vmatprep.subr.bf16.mxu0 0
    %1630 = vmatpush1.bf16.msra.mxu0 0
    %1631 = vmatprep.subr.bf16.mxu0 0
    %1632 = vmatpush1.bf16.msra.mxu0 0
    %1633 = vmatprep.subr.bf16.mxu0 0
    %1634 = vmatpush1.bf16.msra.mxu0 0
    %1635 = vmatprep.subr.bf16.mxu0 0
    %1636 = vmatpush1.bf16.msra.mxu0 0
    %1637 = vmatprep.subr.bf16.mxu0 0
    %1638 = vmatpush1.bf16.msra.mxu0 0
    %1639 = vmatprep.subr.bf16.mxu0 0
    %1640 = vmatpush1.bf16.msra.mxu0 0
    %1641 = vmatprep.subr.bf16.mxu0 0
    %1642 = vmatpush1.bf16.msra.mxu0 0
    %1643 = vmatprep.subr.bf16.mxu0 0
    %1644 = vmatpush1.bf16.msra.mxu0 0
    %1645 = vmatprep.subr.bf16.mxu0 0
    %1646 = vmatpush1.bf16.msra.mxu0 0
    %1647 = vmatprep.mubr.bf16.mxu0 0
    %1648 = vmatmul.mubr.bf16.gmra.mrb[0].mxu0 %v1613
    %v1649 = vpop.f32.mrb[0].mxu0
    %v1650 = vadd.f32 0.0, %v1649
    %v1651 = vpop.f32.mrb[0].mxu0
    %v1652 = vadd.f32 0.0, %v1651
    %v1653 = vpop.f32.mrb[0].mxu0
    %v1654 = vpop.f32.mrb[0].mxu0
    %1655 = vdwg.mxu0
    %v1658 = vrot.slane %v1650, 4
    %v1659 = vrot.slane %v1652, 4
    %v1662 = vadd.f32 %v1442, %v1658
    %v1663 = vadd.f32 %v1443, %v1659
    %v1664 = vxor.u32 %v1662, 2147483648
    %v1665 = vxor.u32 %v1663, 2147483648
    %v1666 = vmul.f32 %v1664, 1.442695
    %v1667 = vpow.pop %v1666
    %v1668 = vmul.f32 %v1665, 1.442695
    %v1669 = vpow.pop %v1668
    %v1670 = vadd.f32 %v1667, 1.0
    %v1671 = vadd.f32 %v1669, 1.0
    %v1672 = vrcp.pop %v1670
    %v1673 = vmul.f32 1.0, %v1672
    %v1674 = vrcp.pop %v1671
    %v1675 = vmul.f32 1.0, %v1674
    %v1676 = vtanh.pop %v1663
    %v1678 = vrot.slane %v1604, 6
    %v1680 = vmul.f32 %v1673, %v1678
    %v1681 = vmul.f32 %v1673, %v1676
    %1683 = vrot.lane.b32.xlu0 %v1681, 64
    %v1684 = vpop.permute.xlu0 %1683
    %v1686 = vadd.f32 %v1680, %v1684
    %v1687 = vtanh.pop %v1686
    %v1688 = vmul.f32 %v1675, %v1687
    %v1689 = vpack.c.bf16 %v1688, %v1688
    %v1691 = vrot.slane %v1689, 2
    %1692 = vrot.lane.b32.xlu0 %v1691, 64
    %v1693 = vpop.permute.xlu0 %1692
    %v1695 = vsel %vm221, %v1693, 0
    %1697 = vmatprep.subr.bf16.mxu0 %v1105
    %1698 = vmatpush1.bf16.msra.mxu0 %v1104
    %1699 = vmatprep.subr.bf16.mxu0 %v1107
    %1700 = vmatpush1.bf16.msra.mxu0 %v1106
    %1701 = vmatprep.subr.bf16.mxu0 %v1109
    %1702 = vmatpush1.bf16.msra.mxu0 %v1108
    %1703 = vmatprep.subr.bf16.mxu0 %v1111
    %1704 = vmatpush1.bf16.msra.mxu0 %v1110
    %1705 = vmatprep.subr.bf16.mxu0 0
    %1706 = vmatpush1.bf16.msra.mxu0 0
    %1707 = vmatprep.subr.bf16.mxu0 0
    %1708 = vmatpush1.bf16.msra.mxu0 0
    %1709 = vmatprep.subr.bf16.mxu0 0
    %1710 = vmatpush1.bf16.msra.mxu0 0
    %1711 = vmatprep.subr.bf16.mxu0 0
    %1712 = vmatpush1.bf16.msra.mxu0 0
    %1713 = vmatprep.subr.bf16.mxu0 0
    %1714 = vmatpush1.bf16.msra.mxu0 0
    %1715 = vmatprep.subr.bf16.mxu0 0
    %1716 = vmatpush1.bf16.msra.mxu0 0
    %1717 = vmatprep.subr.bf16.mxu0 0
    %1718 = vmatpush1.bf16.msra.mxu0 0
    %1719 = vmatprep.subr.bf16.mxu0 0
    %1720 = vmatpush1.bf16.msra.mxu0 0
    %1721 = vmatprep.subr.bf16.mxu0 0
    %1722 = vmatpush1.bf16.msra.mxu0 0
    %1723 = vmatprep.subr.bf16.mxu0 0
    %1724 = vmatpush1.bf16.msra.mxu0 0
    %1725 = vmatprep.subr.bf16.mxu0 0
    %1726 = vmatpush1.bf16.msra.mxu0 0
    %1727 = vmatprep.subr.bf16.mxu0 0
    %1728 = vmatpush1.bf16.msra.mxu0 0
    %1729 = vmatprep.mubr.bf16.mxu0 0
    %1730 = vmatmul.mubr.bf16.gmra.mrb[0].mxu0 %v1695
    %v1731 = vpop.f32.mrb[0].mxu0
    %v1732 = vadd.f32 0.0, %v1731
    %v1733 = vpop.f32.mrb[0].mxu0
    %v1734 = vadd.f32 0.0, %v1733
    %v1735 = vpop.f32.mrb[0].mxu0
    %v1736 = vpop.f32.mrb[0].mxu0
    %1737 = vdwg.mxu0
    %v1740 = vrot.slane %v1732, 2
    %v1741 = vrot.slane %v1734, 2
    %v1744 = vadd.f32 %v1524, %v1740
    %v1745 = vadd.f32 %v1525, %v1741
    %v1746 = vxor.u32 %v1744, 2147483648
    %v1747 = vxor.u32 %v1745, 2147483648
    %v1748 = vmul.f32 %v1746, 1.442695
    %v1749 = vpow.pop %v1748
    %v1750 = vmul.f32 %v1747, 1.442695
    %v1751 = vpow.pop %v1750
    %v1752 = vadd.f32 %v1749, 1.0
    %v1753 = vadd.f32 %v1751, 1.0
    %v1754 = vrcp.pop %v1752
    %v1755 = vmul.f32 1.0, %v1754
    %v1756 = vrcp.pop %v1753
    %v1757 = vmul.f32 1.0, %v1756
    %v1758 = vtanh.pop %v1745
    %v1760 = vrot.slane %v1686, 6
    %v1762 = vmul.f32 %v1755, %v1760
    %v1763 = vmul.f32 %v1755, %v1758
    %1765 = vrot.lane.b32.xlu0 %v1763, 64
    %v1766 = vpop.permute.xlu0 %1765
    %v1768 = vadd.f32 %v1762, %v1766
    %v1769 = vtanh.pop %v1768
    %v1770 = vmul.f32 %v1757, %v1769
    %1772 = vrot.lane.b32.xlu0 %v1184, 64
    %v1773 = vpop.permute.xlu0 %1772
    %v1776 = vrot.slane %v1770, 6
    %1777 = vrot.lane.b32.xlu0 %v1776, 64
    %v1778 = vpop.permute.xlu0 %1777
    %v1780 = vsel %vm126, %v1773, %v1778
    %1782 = vrot.lane.b32.xlu0 %v1271, 64
    %v1783 = vpop.permute.xlu0 %1782
    %v1786 = vrot.slane %v1688, 2
    %1787 = vrot.lane.b32.xlu0 %v1786, 64
    %v1788 = vpop.permute.xlu0 %1787
    %v1790 = vsel %vm126, %v1783, %v1788
    %1792 = vrot.lane.b32.xlu0 %v1353, 64
    %v1793 = vpop.permute.xlu0 %1792
    %v1796 = vrot.slane %v1606, 6
    %1797 = vrot.lane.b32.xlu0 %v1796, 64
    %v1798 = vpop.permute.xlu0 %1797
    %v1800 = vsel %vm126, %v1793, %v1798
    %1802 = vrot.lane.b32.xlu0 %v1435, 64
    %v1803 = vpop.permute.xlu0 %1802
    %v1806 = vrot.slane %v1519, 2
    %1807 = vrot.lane.b32.xlu0 %v1806, 64
    %v1808 = vpop.permute.xlu0 %1807
    %v1810 = vsel %vm126, %v1803, %v1808
    %1811 = vrot.lane.b32.xlu0 %v1519, 64
    %v1812 = vpop.permute.xlu0 %1811
    %v1814 = vrot.slane %v1435, 6
    %1815 = vrot.lane.b32.xlu0 %v1814, 64
    %v1816 = vpop.permute.xlu0 %1815
    %v1818 = vsel %vm126, %v1812, %v1816
    %1819 = vrot.lane.b32.xlu0 %v1606, 64
    %v1820 = vpop.permute.xlu0 %1819
    %v1822 = vrot.slane %v1353, 2
    %1823 = vrot.lane.b32.xlu0 %v1822, 64
    %v1824 = vpop.permute.xlu0 %1823
    %v1826 = vsel %vm126, %v1820, %v1824
    %1827 = vrot.lane.b32.xlu0 %v1688, 64
    %v1828 = vpop.permute.xlu0 %1827
    %v1830 = vrot.slane %v1271, 6
    %1831 = vrot.lane.b32.xlu0 %v1830, 64
    %v1832 = vpop.permute.xlu0 %1831
    %v1834 = vsel %vm126, %v1828, %v1832
    %1835 = vrot.lane.b32.xlu0 %v1770, 64
    %v1836 = vpop.permute.xlu0 %1835
    %v1838 = vrot.slane %v1184, 2
    %1839 = vrot.lane.b32.xlu0 %v1838, 64
    %v1840 = vpop.permute.xlu0 %1839
    %v1842 = vsel %vm126, %v1836, %v1840
    %v1844 = vrot.slane %v1790, 2
    %v1846 = vmax.f32 %v1780, %v1844
    %v1848 = vrot.slane %v1800, 4
    %v1850 = vmax.f32 %v1846, %v1848
    %v1852 = vrot.slane %v1810, 6
    %v1854 = vmax.f32 %v1850, %v1852
    %v1855 = vmax.f32 %v1854, %v1818
    %v1857 = vrot.slane %v1826, 2
    %v1859 = vmax.f32 %v1855, %v1857
    %v1861 = vrot.slane %v1834, 4
    %v1863 = vmax.f32 %v1859, %v1861
    %v1865 = vrot.slane %v1842, 6
    %v1867 = vmax.f32 %v1863, %v1865
    %v1868 = vmax.f32 %v1867, 0.0
    %v1870 = vrot.slane %v79, 2
    %v1872 = vmax.f32 %v79, %v1870
    %v1873 = vrot.slane %v79, 4
    %v1875 = vmax.f32 %v1872, %v1873
    %v1876 = vrot.slane %v79, 6
    %v1878 = vmax.f32 %v1875, %v1876
    %v1879 = vmax.f32 %v1878, %v80
    %v1881 = vrot.slane %v80, 2
    %v1883 = vmax.f32 %v1879, %v1881
    %v1884 = vrot.slane %v80, 4
    %v1886 = vmax.f32 %v1883, %v1884
    %v1887 = vrot.slane %v80, 6
    %v1889 = vmax.f32 %v1886, %v1887
    %v1890 = vmax.f32 %v1889, 0.0
    %1892 = vrot.lane.b32.xlu0 %v1890, 64
    %v1893 = vpop.permute.xlu0 %1892
    %v1895 = vsel %vm221, %v1868, %v1893
    %v1896 = vpack.c.bf16 %v1895, %v1895
    %v1897 = vld [vmem:[%s7] sm:$0xf]
    %v1898 = vld [vmem:[%s7 + $0x4] sm:$0xf]
    %v1899 = vld [vmem:[%s7 + $0x8] sm:$0xf]
    %v1900 = vld [vmem:[%s7 + $0xc] sm:$0xf]
    %v1901 = vld [vmem:[%s7 + $0x10] sm:$0xf]
    %v1902 = vld [vmem:[%s7 + $0x14] sm:$0xf]
    %v1903 = vld [vmem:[%s7 + $0x18] sm:$0xf]
    %v1904 = vld [vmem:[%s7 + $0x1c] sm:$0xf]
    %v1905 = vld [vmem:[%s7 + $0x20] sm:$0xf]
    %v1906 = vld [vmem:[%s7 + $0x24] sm:$0xf]
    %v1907 = vld [vmem:[%s7 + $0x28] sm:$0xf]
    %v1908 = vld [vmem:[%s7 + $0x2c] sm:$0xf]
    %v1909 = vld [vmem:[#allocation2] sm:$0x1]
    %v1911 = vlaneseq
    %v1912 = vshrl.u32 %v1911, 7
    %v1913 = vsub.s32 0, %v1912
    %v1914 = vrot.slane %v1909, %v1913
    %v1928 = vunpack.c.l.b16 %v1897
    %v1929 = vunpack.c.l.b16 %v1898
    %v1930 = vunpack.c.l.b16 %v1899
    %v1931 = vunpack.c.l.b16 %v1900
    %v1932 = vunpack.c.l.b16 %v1901
    %v1933 = vunpack.c.l.b16 %v1902
    %v1934 = vunpack.c.l.b16 %v1903
    %v1935 = vunpack.c.l.b16 %v1904
    %v1936 = vunpack.c.l.b16 %v1905
    %v1937 = vunpack.c.l.b16 %v1906
    %v1938 = vunpack.c.l.b16 %v1907
    %v1939 = vunpack.c.l.b16 %v1908
    %v1940 = vpack.c.b16 %v1929, %v1928
    %v1941 = vpack.c.b16 %v1931, %v1930
    %v1942 = vpack.c.b16 %v1933, %v1932
    %v1943 = vpack.c.b16 %v1935, %v1934
    %v1944 = vpack.c.b16 %v1937, %v1936
    %v1945 = vpack.c.b16 %v1939, %v1938
    %vm1952 = vcmask 785408
    %v1954 = vsel %vm1952, %v1896, 0
    %1956 = vmatprep.subr.bf16.mxu0 0
    %1957 = vmatpush1.bf16.msra.mxu0 %v1940
    %1958 = vmatprep.subr.bf16.mxu0 0
    %1959 = vmatpush1.bf16.msra.mxu0 %v1941
    %1960 = vmatprep.subr.bf16.mxu0 0
    %1961 = vmatpush1.bf16.msra.mxu0 %v1942
    %1962 = vmatprep.subr.bf16.mxu0 0
    %1963 = vmatpush1.bf16.msra.mxu0 %v1943
    %1964 = vmatprep.subr.bf16.mxu0 0
    %1965 = vmatpush1.bf16.msra.mxu0 %v1944
    %1966 = vmatprep.subr.bf16.mxu0 0
    %1967 = vmatpush1.bf16.msra.mxu0 %v1945
    %1968 = vmatprep.subr.bf16.mxu0 0
    %1969 = vmatpush1.bf16.msra.mxu0 0
    %1970 = vmatprep.subr.bf16.mxu0 0
    %1971 = vmatpush1.bf16.msra.mxu0 0
    %1972 = vmatprep.subr.bf16.mxu0 0
    %1973 = vmatpush1.bf16.msra.mxu0 0
    %1974 = vmatprep.subr.bf16.mxu0 0
    %1975 = vmatpush1.bf16.msra.mxu0 0
    %1976 = vmatprep.subr.bf16.mxu0 0
    %1977 = vmatpush1.bf16.msra.mxu0 0
    %1978 = vmatprep.subr.bf16.mxu0 0
    %1979 = vmatpush1.bf16.msra.mxu0 0
    %1980 = vmatprep.subr.bf16.mxu0 0
    %1981 = vmatpush1.bf16.msra.mxu0 0
    %1982 = vmatprep.subr.bf16.mxu0 0
    %1983 = vmatpush1.bf16.msra.mxu0 0
    %1984 = vmatprep.subr.bf16.mxu0 0
    %1985 = vmatpush1.bf16.msra.mxu0 0
    %1986 = vmatprep.subr.bf16.mxu0 0
    %1987 = vmatpush1.bf16.msra.mxu0 0
    %1988 = vmatprep.mubr.bf16.mxu0 0
    %1989 = vmatmul.mubr.bf16.gmra.mrb[0].mxu0 %v1954
    %v1990 = vpop.f32.mrb[0].mxu0
    %v1991 = vadd.f32 %v1914, %v1990
    %v1992 = vpop.f32.mrb[0].mxu0
    %v1993 = vpop.f32.mrb[0].mxu0
    %v1994 = vpop.f32.mrb[0].mxu0
    %1995 = vdwg.mxu0
    %v1996 = vsel %vm948, %v1991, -inf
    %1997 = vmax.xlane.f32.xlu0 %v1996
    %v1998 = vpop.xlane.xlu0 %1997
    %v1999 = vsub.f32 %v1991, %v1998
    %v2000 = vmul.f32 %v1999, 1.442695
    %v2001 = vpow.pop %v2000
    %v2002 = vsel %vm948, %v2001, 0.0
    %2003 = vadd.xlane.f32.xlu0 %v2002
    %v2004 = vpop.xlane.xlu0 %2003
    %v2005 = vrcp.pop %v2004
    %v2006 = vmul.f32 %v2001, %v2005
    %2007 = vst [vmem:[#allocation5] sm:$0x3] %v2006
    // Predicated region
    $region42: #{model_forward.1} parent=1 // pred_check
      _
    $region43: #{model_forward.1} parent=1 // pred_check_branch
      %2009 = sbr.rel (0) target = $region45
    $region44: #{model_forward.1} parent=1 // pred_region
      %s2011 = ssub.s32 32, 32
      %2012 = vsyncadd [#allocation4], %s2011
      %s2014 = sshll.u32 [#allocation5], 4
      %s2015 = int_to_ptr.vmem [resolvable:$true] %s2014
      %2017 = dma.vmem_to_hbm [thread:$0]  %s2015, 32, %s9, [#allocation4]
    $region45: #{model_forward.1} parent=1 // pred_fallthru
      _
    // Predicated region
    $region46: #{model_forward.1} parent=1 // pred_check
      _
    $region47: #{model_forward.1} parent=1 // pred_check_branch
      %2019 = sbr.rel (0) target = $region49
    $region48: #{model_forward.1} parent=1 // pred_region
      %2020 = dma.done [#allocation4], 32
    $region49: #{model_forward.1} parent=1 // pred_fallthru
      _
    %2021 = vsyncpa [#allocation3], 1
    %2022 = vsyncpa [#allocation4], 1

</llo_original>
